<compile_context>
chip_gen: v7x
topology: tpu7x:2x2x1
jax: 0.10.0
libtpu: 0.0.40
codegen_flags: <defaults>
</compile_context>

<pallas_src>
import jax
import jax.numpy as jnp
from jax.experimental import pallas as pl
from jax.experimental.pallas import tpu as pltpu

LANE = 128       # TPU lane width (minor-dim granularity)
SUB_BF16 = 16    # bf16 sublane tile
SUB_F32 = 8      # f32 sublane tile


def _round_up(x, m):
    return (x + m - 1) // m * m


def _cdiv(a, b):
    return -(-a // b)


def _pick_vmem_limit():
    """Scoped-VMEM budget: ~3/4 of physical VMEM, capped at 96 MiB.
    (v7x: 64 MiB physical -> 48 MiB; v5e/v6e: 128 MiB -> 96 MiB)."""
    try:
        cap = int(pltpu.get_tpu_info().vmem_capacity_bytes)
    except Exception:
        cap = 64 * 1024 * 1024
    return int(min(cap * 3 // 4, 96 * 1024 * 1024))


def _choose_tiling(n, tile_n):
    """Pick (tile, n_tiles, padded_n).  Batch is padded only to a 128 multiple;
    for batches big enough to split we force n_tiles >= 2 so the 'parallel'
    grid axis can be spread across both TensorCores on v7x (harmless on
    single-TC chips: one extra ~0.35us grid step)."""
    rows = _round_up(max(n, 1), LANE)
    tile_n = min(max(LANE, _round_up(tile_n, LANE)), 8192)   # v7x-safe cap
    g = _cdiv(rows, tile_n)
    if g == 1 and rows >= 4 * LANE:
        g = 2
    tile = _round_up(_cdiv(rows, g), LANE)
    g = _cdiv(rows, tile)
    return tile, g, g * tile


def _pack_params(params, in_pad, out_pad):
    """Pack weights (bf16, PyTorch (out,in) order) and biases (f32) into two
    constant blobs; returns (w_pack, b_pack, layer_meta). layer_meta[i] =
    (row_offset, n_out_eff, n_in_eff) with the first layer's input padded to
    `in_pad` and the last layer's output padded to `out_pad` (zero rows/cols)."""
    outs = [int(w.shape[0]) for w, _ in params]
    ins = [int(w.shape[1]) for w, _ in params]
    ins_eff = [in_pad] + ins[1:]
    outs_eff = outs[:-1] + [out_pad]

    offsets = [0]
    for o in outs_eff:
        offsets.append(offsets[-1] + o)
    total_rows = _round_up(offsets[-1], SUB_BF16)
    max_in = max(ins_eff)

    w_pack = jnp.zeros((total_rows, max_in), jnp.bfloat16)
    b_pack = jnp.zeros((total_rows, 1), jnp.float32)
    for i, (w, b) in enumerate(params):
        off = offsets[i]
        w_pack = w_pack.at[off:off + outs[i], :ins[i]].set(w.astype(jnp.bfloat16))
        b_pack = b_pack.at[off:off + outs[i], 0].set(
            b.astype(jnp.float32).reshape(-1))

    layer_meta = tuple((offsets[i], outs_eff[i], ins_eff[i])
                       for i in range(len(params)))
    return w_pack, b_pack, layer_meta


def net_forward(x, params, *, tile_n=4096):
    """x: [N, 24] float32.  params: list of 8 (W [out, in], b [out]) float32
    pairs (PyTorch nn.Linear layout).  Returns [N, out_dim] float32, matching
    `relu(x @ W.T + b)` chained with no ReLU after the last layer."""
    N, in_dim = x.shape
    n_layers = len(params)
    out_dim = int(params[-1][0].shape[0])

    # Feature padding: first-layer input to the bf16 sublane tile, final output
    # rows to the f32 sublane tile (padded rows are exact zeros -> dense store).
    in_pad = _round_up(in_dim, SUB_BF16)
    out_pad = _round_up(out_dim, SUB_F32)

    # In real use you would pack once and reuse; it is a handful of tiny ops.
    w_pack, b_pack, layer_meta = _pack_params(params, in_pad, out_pad)

    # Batch tiling (batch lives on the lane axis inside the kernel).
    tile, n_tiles, padded_n = _choose_tiling(N, tile_n)

    # Transposed bf16 input: (features, batch) with batch on lanes.
    xb = jnp.pad(x.astype(jnp.bfloat16),
                 ((0, padded_n - N), (0, in_pad - in_dim)))
    x_t = xb.T  # (in_pad, padded_n)

    def kernel(x_ref, w_ref, b_ref, o_ref):
        # x_ref: (in_pad, tile) bf16 ; w_ref: (rows, max_in) bf16 ;
        # b_ref: (rows, 1) f32      ; o_ref: (out_pad, tile) f32.
        h = x_ref[...]
        for li, (off, n_out, n_in) in enumerate(layer_meta):
            w = w_ref[off:off + n_out, :n_in]                       # (n_out, n_in) bf16
            y = jnp.dot(w, h, preferred_element_type=jnp.float32)   # MXU, f32 acc
            y = y + b_ref[off:off + n_out, :]                       # bias bcast over lanes
            if li < n_layers - 1:
                h = jnp.maximum(y, 0.0).astype(jnp.bfloat16)        # bf16 intermediates
            else:
                o_ref[...] = y.astype(o_ref.dtype)                  # lane-dense store

    out_t = pl.pallas_call(
        kernel,
        out_shape=jax.ShapeDtypeStruct((out_pad, padded_n), jnp.float32),
        grid_spec=pltpu.PrefetchScalarGridSpec(
            num_scalar_prefetch=0,
            grid=(n_tiles,),
            in_specs=[
                pl.BlockSpec((in_pad, tile), lambda i: (0, i)),
                pl.BlockSpec(w_pack.shape, lambda i: (0, 0)),   # resident constants
                pl.BlockSpec(b_pack.shape, lambda i: (0, 0)),   # (DMA'd once)
            ],
            out_specs=pl.BlockSpec((out_pad, tile), lambda i: (0, i)),
        ),
        compiler_params=pltpu.CompilerParams(
            dimension_semantics=("parallel",),
            vmem_limit_bytes=_pick_vmem_limit(),
        ),
    )(x_t, w_pack, b_pack)

    # Padded rows/lanes are exact zeros / dead batch columns; slice + transpose.
    return out_t[:out_dim, :N].T


def init_params(key, output_size):
    """Deterministic init mimicking PyTorch's default Linear init:
    U(-1/sqrt(fan_in), 1/sqrt(fan_in)); W has PyTorch (out, in) layout."""
    dims = [24, 32, 64, 128, 256, 128, 64, 32, output_size]
    params = []
    for fan_in, fan_out in zip(dims[:-1], dims[1:]):
        key, kw, kb = jax.random.split(key, 3)
        bound = 1.0 / float(fan_in) ** 0.5
        w = jax.random.uniform(kw, (fan_out, fan_in), jnp.float32, -bound, bound)
        b = jax.random.uniform(kb, (fan_out,), jnp.float32, -bound, bound)
        params.append((w, b))
    return params


def net_forward_ref(x, params):
    """Pure-JAX reference at the kernel's precision (bf16 MXU inputs, f32
    accumulation / bias / ReLU, bf16 inter-layer activations).  Note: parity
    with a true f32 PyTorch forward is looser than this matched-precision
    check across 8 chained bf16 matmuls."""
    h = x.astype(jnp.bfloat16)
    y = None
    for i, (w, b) in enumerate(params):
        y = jnp.dot(h, w.T.astype(jnp.bfloat16),
                    preferred_element_type=jnp.float32) + b.astype(jnp.float32)
        if i < len(params) - 1:
            h = jnp.maximum(y, 0.0).astype(jnp.bfloat16)
    return y


if __name__ == "__main__":
    key = jax.random.PRNGKey(0)
    output_size = 8
    k_params, k1, k2, k3 = jax.random.split(key, 4)
    params = init_params(k_params, output_size)

    # Small shape implied by the module (num_context x 24): grid collapses to (1,).
    x_small = jax.random.normal(k1, (16, 24), jnp.float32)
    out_small = jax.block_until_ready(net_forward(x_small, params))
    assert out_small.shape == (16, output_size)
    assert jnp.allclose(out_small, net_forward_ref(x_small, params),
                        atol=5e-3, rtol=5e-3), "mismatch (small)"

    # Awkward N exercises 128-granular batch padding + the dual-core split.
    x_mid = jax.random.normal(k2, (600, 24), jnp.float32)
    out_mid = jax.block_until_ready(net_forward(x_mid, params))
    assert out_mid.shape == (600, output_size)
    assert jnp.allclose(out_mid, net_forward_ref(x_mid, params),
                        atol=5e-3, rtol=5e-3), "mismatch (mid)"

    # Larger batch: multi-step parallel grid (both TensorCores on v7x).
    x_big = jax.random.normal(k3, (1024, 24), jnp.float32)
    out_big = jax.block_until_ready(net_forward(x_big, params, tile_n=4096))
    assert out_big.shape == (1024, output_size)
    assert jnp.allclose(out_big, net_forward_ref(x_big, params),
                        atol=5e-3, rtol=5e-3), "mismatch (big)"

    print("KERNEL_OK")
</pallas_src>

<mosaic_0001>
module attributes {stable_mosaic.version = 11 : i64} {
  func.func @kernel(%arg0: i32, %arg1: memref<32x128xbf16, #tpu.memory_space<vmem>>, %arg2: memref<720x256xbf16, #tpu.memory_space<vmem>>, %arg3: memref<720x1xf32, #tpu.memory_space<vmem>>, %arg4: memref<8x128xf32, #tpu.memory_space<vmem>>) attributes {dimension_semantics = [#tpu.dimension_semantics<parallel>], iteration_bounds = array<i64: 1>, scalar_prefetch = 0 : i64, scratch_operands = 0 : i64, tpu.core_type = #tpu.core_type<tc>, window_params = [{transform_indices = @transform_0, window_bounds = array<i64: 32, 128>}, {pipeline_mode = #tpu.pipeline_mode<synchronous>, transform_indices = @transform_1, window_bounds = array<i64: 720, 256>}, {pipeline_mode = #tpu.pipeline_mode<synchronous>, transform_indices = @transform_2, window_bounds = array<i64: 720, 1>}, {transform_indices = @transform_3, window_bounds = array<i64: 8, 128>}]} {
    %c0 = arith.constant 0 : index
    %c0_0 = arith.constant 0 : index
    %0 = vector.load %arg1[%c0, %c0_0] : memref<32x128xbf16, #tpu.memory_space<vmem>>, vector<32x128xbf16>
    %c0_1 = arith.constant 0 : index
    %c0_2 = arith.constant 0 : index
    %1 = vector.load %arg2[%c0_1, %c0_2] : memref<720x256xbf16, #tpu.memory_space<vmem>>, vector<32x32xbf16>
    %cst = arith.constant dense<0.000000e+00> : vector<32x128xf32>
    %2 = tpu.matmul %1, %0, %cst {dimension_numbers = #tpu.dot_dimension_numbers<[1], [0], [0], [1], [0, 0, 1, 1], [], []>} : vector<32x32xbf16>, vector<32x128xbf16>, vector<32x128xf32> -> vector<32x128xf32>
    %c0_3 = arith.constant 0 : index
    %c0_4 = arith.constant 0 : index
    %3 = vector.load %arg3[%c0_3, %c0_4] : memref<720x1xf32, #tpu.memory_space<vmem>>, vector<32x1xf32>
    %4 = vector.broadcast %3 : vector<32x1xf32> to vector<32x128xf32>
    %5 = arith.addf %2, %4 : vector<32x128xf32>
    %cst_5 = arith.constant 0.000000e+00 : f32
    %6 = vector.broadcast %cst_5 : f32 to vector<32x128xf32>
    %7 = arith.maximumf %5, %6 : vector<32x128xf32>
    %8 = arith.truncf %7 : vector<32x128xf32> to vector<32x128xbf16>
    %c32 = arith.constant 32 : index
    %c0_6 = arith.constant 0 : index
    %9 = vector.load %arg2[%c32, %c0_6] : memref<720x256xbf16, #tpu.memory_space<vmem>>, vector<64x32xbf16>
    %cst_7 = arith.constant dense<0.000000e+00> : vector<64x128xf32>
    %10 = tpu.matmul %9, %8, %cst_7 {dimension_numbers = #tpu.dot_dimension_numbers<[1], [0], [0], [1], [0, 0, 1, 1], [], []>} : vector<64x32xbf16>, vector<32x128xbf16>, vector<64x128xf32> -> vector<64x128xf32>
    %c32_8 = arith.constant 32 : index
    %c0_9 = arith.constant 0 : index
    %11 = vector.load %arg3[%c32_8, %c0_9] : memref<720x1xf32, #tpu.memory_space<vmem>>, vector<64x1xf32>
    %12 = vector.broadcast %11 : vector<64x1xf32> to vector<64x128xf32>
    %13 = arith.addf %10, %12 : vector<64x128xf32>
    %cst_10 = arith.constant 0.000000e+00 : f32
    %14 = vector.broadcast %cst_10 : f32 to vector<64x128xf32>
    %15 = arith.maximumf %13, %14 : vector<64x128xf32>
    %16 = arith.truncf %15 : vector<64x128xf32> to vector<64x128xbf16>
    %c96 = arith.constant 96 : index
    %c0_11 = arith.constant 0 : index
    %17 = vector.load %arg2[%c96, %c0_11] : memref<720x256xbf16, #tpu.memory_space<vmem>>, vector<128x64xbf16>
    %cst_12 = arith.constant dense<0.000000e+00> : vector<128x128xf32>
    %18 = tpu.matmul %17, %16, %cst_12 {dimension_numbers = #tpu.dot_dimension_numbers<[1], [0], [0], [1], [0, 0, 1, 1], [], []>} : vector<128x64xbf16>, vector<64x128xbf16>, vector<128x128xf32> -> vector<128x128xf32>
    %c96_13 = arith.constant 96 : index
    %c0_14 = arith.constant 0 : index
    %19 = vector.load %arg3[%c96_13, %c0_14] : memref<720x1xf32, #tpu.memory_space<vmem>>, vector<128x1xf32>
    %20 = vector.broadcast %19 : vector<128x1xf32> to vector<128x128xf32>
    %21 = arith.addf %18, %20 : vector<128x128xf32>
    %cst_15 = arith.constant 0.000000e+00 : f32
    %22 = vector.broadcast %cst_15 : f32 to vector<128x128xf32>
    %23 = arith.maximumf %21, %22 : vector<128x128xf32>
    %24 = arith.truncf %23 : vector<128x128xf32> to vector<128x128xbf16>
    %c224 = arith.constant 224 : index
    %c0_16 = arith.constant 0 : index
    %25 = vector.load %arg2[%c224, %c0_16] : memref<720x256xbf16, #tpu.memory_space<vmem>>, vector<256x128xbf16>
    %cst_17 = arith.constant dense<0.000000e+00> : vector<256x128xf32>
    %26 = tpu.matmul %25, %24, %cst_17 {dimension_numbers = #tpu.dot_dimension_numbers<[1], [0], [0], [1], [0, 0, 1, 1], [], []>} : vector<256x128xbf16>, vector<128x128xbf16>, vector<256x128xf32> -> vector<256x128xf32>
    %c224_18 = arith.constant 224 : index
    %c0_19 = arith.constant 0 : index
    %27 = vector.load %arg3[%c224_18, %c0_19] : memref<720x1xf32, #tpu.memory_space<vmem>>, vector<256x1xf32>
    %28 = vector.broadcast %27 : vector<256x1xf32> to vector<256x128xf32>
    %29 = arith.addf %26, %28 : vector<256x128xf32>
    %cst_20 = arith.constant 0.000000e+00 : f32
    %30 = vector.broadcast %cst_20 : f32 to vector<256x128xf32>
    %31 = arith.maximumf %29, %30 : vector<256x128xf32>
    %32 = arith.truncf %31 : vector<256x128xf32> to vector<256x128xbf16>
    %c480 = arith.constant 480 : index
    %c0_21 = arith.constant 0 : index
    %33 = vector.load %arg2[%c480, %c0_21] : memref<720x256xbf16, #tpu.memory_space<vmem>>, vector<128x256xbf16>
    %cst_22 = arith.constant dense<0.000000e+00> : vector<128x128xf32>
    %34 = tpu.matmul %33, %32, %cst_22 {dimension_numbers = #tpu.dot_dimension_numbers<[1], [0], [0], [1], [0, 0, 1, 1], [], []>} : vector<128x256xbf16>, vector<256x128xbf16>, vector<128x128xf32> -> vector<128x128xf32>
    %c480_23 = arith.constant 480 : index
    %c0_24 = arith.constant 0 : index
    %35 = vector.load %arg3[%c480_23, %c0_24] : memref<720x1xf32, #tpu.memory_space<vmem>>, vector<128x1xf32>
    %36 = vector.broadcast %35 : vector<128x1xf32> to vector<128x128xf32>
    %37 = arith.addf %34, %36 : vector<128x128xf32>
    %cst_25 = arith.constant 0.000000e+00 : f32
    %38 = vector.broadcast %cst_25 : f32 to vector<128x128xf32>
    %39 = arith.maximumf %37, %38 : vector<128x128xf32>
    %40 = arith.truncf %39 : vector<128x128xf32> to vector<128x128xbf16>
    %c608 = arith.constant 608 : index
    %c0_26 = arith.constant 0 : index
    %41 = vector.load %arg2[%c608, %c0_26] : memref<720x256xbf16, #tpu.memory_space<vmem>>, vector<64x128xbf16>
    %cst_27 = arith.constant dense<0.000000e+00> : vector<64x128xf32>
    %42 = tpu.matmul %41, %40, %cst_27 {dimension_numbers = #tpu.dot_dimension_numbers<[1], [0], [0], [1], [0, 0, 1, 1], [], []>} : vector<64x128xbf16>, vector<128x128xbf16>, vector<64x128xf32> -> vector<64x128xf32>
    %c608_28 = arith.constant 608 : index
    %c0_29 = arith.constant 0 : index
    %43 = vector.load %arg3[%c608_28, %c0_29] : memref<720x1xf32, #tpu.memory_space<vmem>>, vector<64x1xf32>
    %44 = vector.broadcast %43 : vector<64x1xf32> to vector<64x128xf32>
    %45 = arith.addf %42, %44 : vector<64x128xf32>
    %cst_30 = arith.constant 0.000000e+00 : f32
    %46 = vector.broadcast %cst_30 : f32 to vector<64x128xf32>
    %47 = arith.maximumf %45, %46 : vector<64x128xf32>
    %48 = arith.truncf %47 : vector<64x128xf32> to vector<64x128xbf16>
    %c672 = arith.constant 672 : index
    %c0_31 = arith.constant 0 : index
    %49 = vector.load %arg2[%c672, %c0_31] : memref<720x256xbf16, #tpu.memory_space<vmem>>, vector<32x64xbf16>
    %cst_32 = arith.constant dense<0.000000e+00> : vector<32x128xf32>
    %50 = tpu.matmul %49, %48, %cst_32 {dimension_numbers = #tpu.dot_dimension_numbers<[1], [0], [0], [1], [0, 0, 1, 1], [], []>} : vector<32x64xbf16>, vector<64x128xbf16>, vector<32x128xf32> -> vector<32x128xf32>
    %c672_33 = arith.constant 672 : index
    %c0_34 = arith.constant 0 : index
    %51 = vector.load %arg3[%c672_33, %c0_34] : memref<720x1xf32, #tpu.memory_space<vmem>>, vector<32x1xf32>
    %52 = vector.broadcast %51 : vector<32x1xf32> to vector<32x128xf32>
    %53 = arith.addf %50, %52 : vector<32x128xf32>
    %cst_35 = arith.constant 0.000000e+00 : f32
    %54 = vector.broadcast %cst_35 : f32 to vector<32x128xf32>
    %55 = arith.maximumf %53, %54 : vector<32x128xf32>
    %56 = arith.truncf %55 : vector<32x128xf32> to vector<32x128xbf16>
    %c704 = arith.constant 704 : index
    %c0_36 = arith.constant 0 : index
    %57 = vector.load %arg2[%c704, %c0_36] : memref<720x256xbf16, #tpu.memory_space<vmem>>, vector<8x32xbf16>
    %cst_37 = arith.constant dense<0.000000e+00> : vector<8x128xf32>
    %58 = tpu.matmul %57, %56, %cst_37 {dimension_numbers = #tpu.dot_dimension_numbers<[1], [0], [0], [1], [0, 0, 1, 1], [], []>} : vector<8x32xbf16>, vector<32x128xbf16>, vector<8x128xf32> -> vector<8x128xf32>
    %c704_38 = arith.constant 704 : index
    %c0_39 = arith.constant 0 : index
    %59 = vector.load %arg3[%c704_38, %c0_39] : memref<720x1xf32, #tpu.memory_space<vmem>>, vector<8x1xf32>
    %60 = vector.broadcast %59 : vector<8x1xf32> to vector<8x128xf32>
    %61 = arith.addf %58, %60 : vector<8x128xf32>
    %c0_40 = arith.constant 0 : index
    %c0_41 = arith.constant 0 : index
    %62 = vector.load %arg4[%c0_40, %c0_41] : memref<8x128xf32, #tpu.memory_space<vmem>>, vector<8x128xf32>
    tpu.vector_store %arg4[%c0_40, %c0_41], %61 {strides = array<i32>} : memref<8x128xf32, #tpu.memory_space<vmem>>, vector<8x128xf32>,
    return
  }
  func.func @transform_0(%arg0: i32) -> (i32, i32) {
    %c0_i32 = arith.constant 0 : i32
    %c0_i32_0 = arith.constant 0 : i32
    return %c0_i32, %arg0 : i32, i32
  }
  func.func @transform_1(%arg0: i32) -> (i32, i32) {
    %c0_i32 = arith.constant 0 : i32
    %c0_i32_0 = arith.constant 0 : i32
    %c0_i32_1 = arith.constant 0 : i32
    return %c0_i32, %c0_i32_0 : i32, i32
  }
  func.func @transform_2(%arg0: i32) -> (i32, i32) {
    %c0_i32 = arith.constant 0 : i32
    %c0_i32_0 = arith.constant 0 : i32
    %c0_i32_1 = arith.constant 0 : i32
    return %c0_i32, %c0_i32_0 : i32, i32
  }
  func.func @transform_3(%arg0: i32) -> (i32, i32) {
    %c0_i32 = arith.constant 0 : i32
    %c0_i32_0 = arith.constant 0 : i32
    return %c0_i32, %arg0 : i32, i32
  }
}

</mosaic_0001>

<llo_original>
// kernel: tpu_custom_call.1
$region0: #{tpu_custom_call.1}
  #allocation0 [shape = 'u32[]', space=smem, size = 0x4, offset = 0x4, fixed_abs, tag = 'smem constant byte address 0x4 - core index']
  #allocation1 [shape = 'u32[144,128]{1,0:T(1,128)}', space=vmem, size = 0x12000, scoped, tag = 'internal scratch']
  %s0 = inlined_call_operand.hbm [shape: bf16[32,128], index: 0, kind: input, shape index: {}]
  %s1 = inlined_call_operand.vmem [shape: bf16[720,256], index: 1, kind: input, shape index: {}]
  %s2 = inlined_call_operand.vmem [shape: f32[720,1], index: 2, kind: input, shape index: {}]
  %s3 = inlined_call_operand.hbm [shape: f32[8,128], index: 3, kind: output, shape index: {}]
  %s4 = sld [smem:[#allocation0]]
  $region26: #{tpu_custom_call.1} parent=0
    _
  %s6 = ssub.s32 1, %s4
  %s7 = scalar_select 0, %s6, %s4
  $region1: #{tpu_custom_call.1} parent=0
    #allocation2 [shape = 'u8[8192]{0}', space=vmem, size = 0x2000, scoped, tag = 'input window, operand 0, single buffered']
    #allocation3 [shape = 's32[1]{0}', space=sflag, size = 0x4, scoped, tag = 'scoped memory for tpu_custom_call.1']
    #allocation4 [shape = 's32[1]{0}', space=sflag, size = 0x4, scoped, tag = 'scoped memory for tpu_custom_call.1']
    #allocation5 [shape = 'u8[4096]{0}', space=vmem, size = 0x1000, scoped, tag = 'output window, operand 0, single buffered']
    %8 = vsyncpa [#allocation3], 0
    %9 = vsyncpa [#allocation4], 0
    // Predicated region
    $region2: #{tpu_custom_call.1} parent=1 // pred_check
      _
    $region3: #{tpu_custom_call.1} parent=1 // pred_check_branch
      %11 = sbr.rel (0) target = $region5
    $region4: #{tpu_custom_call.1} parent=1 // pred_region
      %s13 = ssub.s32 256, 256
      %14 = vsyncadd [#allocation3], %s13
      %s15 = sshll.u32 [#allocation2], 4
      %s16 = int_to_ptr.vmem [resolvable:$true] %s15
      %21 = dma.hbm_to_vmem [thread:$0]  %s0, 256, %s16, [#allocation3], 64, 64, 4
    $region5: #{tpu_custom_call.1} parent=1 // pred_fallthru
      _
    // Predicated region
    $region6: #{tpu_custom_call.1} parent=1 // pred_check
      _
    $region7: #{tpu_custom_call.1} parent=1 // pred_check_branch
      %23 = sbr.rel (0) target = $region9
    $region8: #{tpu_custom_call.1} parent=1 // pred_region
      _
    $region9: #{tpu_custom_call.1} parent=1 // pred_fallthru
      _
    // Predicated region
    $region10: #{tpu_custom_call.1} parent=1 // pred_check
      _
    $region11: #{tpu_custom_call.1} parent=1 // pred_check_branch
      %25 = sbr.rel (0) target = $region13
    $region12: #{tpu_custom_call.1} parent=1 // pred_region
      _
    $region13: #{tpu_custom_call.1} parent=1 // pred_fallthru
      _
    // Predicated region
    $region14: #{tpu_custom_call.1} parent=1 // pred_check
      _
    $region15: #{tpu_custom_call.1} parent=1 // pred_check_branch
      %27 = sbr.rel (0) target = $region17
    $region16: #{tpu_custom_call.1} parent=1 // pred_region
      %28 = dma.done [#allocation3], 256
    $region17: #{tpu_custom_call.1} parent=1 // pred_fallthru
      _
    %v30 = vld [vmem:[#allocation2] sm:$0xf]
    %v31 = vld [vmem:[#allocation2 + $0x4] sm:$0xf]
    %v32 = vld [vmem:[#allocation2 + $0x8] sm:$0xf]
    %v33 = vld [vmem:[#allocation2 + $0xc] sm:$0xf]
    %v34 = vld [vmem:[%s1] sm:$0xf]
    %v35 = vld [vmem:[%s1 + $0x8] sm:$0xf]
    %v36 = vld [vmem:[%s1 + $0x10] sm:$0xf]
    %v37 = vld [vmem:[%s1 + $0x18] sm:$0xf]
    %v38 = vld [vmem:[%s2] sm:$0xff]
    %v39 = vld [vmem:[%s2 + $0x8] sm:$0xff]
    %v40 = vld [vmem:[%s2 + $0x10] sm:$0xff]
    %v41 = vld [vmem:[%s2 + $0x18] sm:$0xff]
    %43 = vset.pattern.permute.xlu0 0
    %44 = vperm.xlu0 %43, %v38
    %v45 = vpop.permute.xlu0 %44
    %48 = vset.pattern.permute.xlu0 0
    %49 = vperm.xlu0 %48, %v39
    %v50 = vpop.permute.xlu0 %49
    %53 = vset.pattern.permute.xlu0 0
    %54 = vperm.xlu0 %53, %v40
    %v55 = vpop.permute.xlu0 %54
    %58 = vset.pattern.permute.xlu0 0
    %59 = vperm.xlu0 %58, %v41
    %v60 = vpop.permute.xlu0 %59
    %v66 = vunpack.c.l.b16 %v34
    %v67 = vunpack.c.l.b16 %v35
    %v68 = vunpack.c.l.b16 %v36
    %v69 = vunpack.c.l.b16 %v37
    %v70 = vpack.c.b16 %v67, %v66
    %v71 = vpack.c.b16 %v69, %v68
    %v76 = vunpack.c.l.b16 %v30
    %v77 = vunpack.c.l.b16 %v31
    %v78 = vunpack.c.l.b16 %v32
    %v79 = vunpack.c.l.b16 %v33
    %v80 = vpack.c.b16 %v77, %v76
    %v81 = vpack.c.b16 %v79, %v78
    %vm84 = vcmask 261120
    %v86 = vsel %vm84, %v70, 0
    %v89 = vsel %vm84, %v71, 0
    %91 = vmatprep.subr.bf16.mxu0 0
    %92 = vmatpush1.bf16.msra.mxu0 %v80
    %93 = vmatprep.subr.bf16.mxu0 0
    %94 = vmatpush1.bf16.msra.mxu0 %v81
    %95 = vmatprep.subr.bf16.mxu0 0
    %96 = vmatpush1.bf16.msra.mxu0 0
    %97 = vmatprep.subr.bf16.mxu0 0
    %98 = vmatpush1.bf16.msra.mxu0 0
    %99 = vmatprep.subr.bf16.mxu0 0
    %100 = vmatpush1.bf16.msra.mxu0 0
    %101 = vmatprep.subr.bf16.mxu0 0
    %102 = vmatpush1.bf16.msra.mxu0 0
    %103 = vmatprep.subr.bf16.mxu0 0
    %104 = vmatpush1.bf16.msra.mxu0 0
    %105 = vmatprep.subr.bf16.mxu0 0
    %106 = vmatpush1.bf16.msra.mxu0 0
    %107 = vmatprep.subr.bf16.mxu0 0
    %108 = vmatpush1.bf16.msra.mxu0 0
    %109 = vmatprep.subr.bf16.mxu0 0
    %110 = vmatpush1.bf16.msra.mxu0 0
    %111 = vmatprep.subr.bf16.mxu0 0
    %112 = vmatpush1.bf16.msra.mxu0 0
    %113 = vmatprep.subr.bf16.mxu0 0
    %114 = vmatpush1.bf16.msra.mxu0 0
    %115 = vmatprep.subr.bf16.mxu0 0
    %116 = vmatpush1.bf16.msra.mxu0 0
    %117 = vmatprep.subr.bf16.mxu0 0
    %118 = vmatpush1.bf16.msra.mxu0 0
    %119 = vmatprep.subr.bf16.mxu0 0
    %120 = vmatpush1.bf16.msra.mxu0 0
    %121 = vmatprep.subr.bf16.mxu0 0
    %122 = vmatpush1.bf16.msra.mxu0 0
    %123 = vmatprep.mubr.bf16.mxu0 0
    %124 = vmatmul.mubr.bf16.gmra.mrb[0].mxu0 %v86
    %v125 = vpop.f32.mrb[0].mxu0
    %v126 = vadd.f32 %v45, %v125
    %v127 = vpop.f32.mrb[0].mxu0
    %v128 = vpop.f32.mrb[0].mxu0
    %v129 = vadd.f32 %v50, %v128
    %v130 = vpop.f32.mrb[0].mxu0
    %131 = vmatprep.mubr.bf16.mxu0 0
    %132 = vmatmul.mubr.bf16.gmra.mrb[0].mxu0 %v89
    %v133 = vpop.f32.mrb[0].mxu0
    %v134 = vadd.f32 %v55, %v133
    %v135 = vpop.f32.mrb[0].mxu0
    %v136 = vpop.f32.mrb[0].mxu0
    %v137 = vadd.f32 %v60, %v136
    %v138 = vpop.f32.mrb[0].mxu0
    %139 = vdwg.mxu0
    %v140 = vmax.f32 %v126, 0.0
    %v141 = vmax.f32 %v129, 0.0
    %v142 = vmax.f32 %v134, 0.0
    %v143 = vmax.f32 %v137, 0.0
    %v144 = vpack.c.bf16 %v141, %v140
    %v145 = vpack.c.bf16 %v143, %v142
    %v146 = vld [vmem:[%s1 + $0x20] sm:$0xf]
    %v147 = vld [vmem:[%s1 + $0x28] sm:$0xf]
    %v148 = vld [vmem:[%s1 + $0x30] sm:$0xf]
    %v149 = vld [vmem:[%s1 + $0x38] sm:$0xf]
    %v150 = vld [vmem:[%s1 + $0x40] sm:$0xf]
    %v151 = vld [vmem:[%s1 + $0x48] sm:$0xf]
    %v152 = vld [vmem:[%s1 + $0x50] sm:$0xf]
    %v153 = vld [vmem:[%s1 + $0x58] sm:$0xf]
    %v154 = vld [vmem:[%s2 + $0x20] sm:$0xff]
    %v155 = vld [vmem:[%s2 + $0x28] sm:$0xff]
    %v156 = vld [vmem:[%s2 + $0x30] sm:$0xff]
    %v157 = vld [vmem:[%s2 + $0x38] sm:$0xff]
    %v158 = vld [vmem:[%s2 + $0x40] sm:$0xff]
    %v159 = vld [vmem:[%s2 + $0x48] sm:$0xff]
    %v160 = vld [vmem:[%s2 + $0x50] sm:$0xff]
    %v161 = vld [vmem:[%s2 + $0x58] sm:$0xff]
    %163 = vset.pattern.permute.xlu0 0
    %164 = vperm.xlu0 %163, %v154
    %v165 = vpop.permute.xlu0 %164
    %168 = vset.pattern.permute.xlu0 0
    %169 = vperm.xlu0 %168, %v155
    %v170 = vpop.permute.xlu0 %169
    %173 = vset.pattern.permute.xlu0 0
    %174 = vperm.xlu0 %173, %v156
    %v175 = vpop.permute.xlu0 %174
    %178 = vset.pattern.permute.xlu0 0
    %179 = vperm.xlu0 %178, %v157
    %v180 = vpop.permute.xlu0 %179
    %183 = vset.pattern.permute.xlu0 0
    %184 = vperm.xlu0 %183, %v158
    %v185 = vpop.permute.xlu0 %184
    %188 = vset.pattern.permute.xlu0 0
    %189 = vperm.xlu0 %188, %v159
    %v190 = vpop.permute.xlu0 %189
    %193 = vset.pattern.permute.xlu0 0
    %194 = vperm.xlu0 %193, %v160
    %v195 = vpop.permute.xlu0 %194
    %198 = vset.pattern.permute.xlu0 0
    %199 = vperm.xlu0 %198, %v161
    %v200 = vpop.permute.xlu0 %199
    %v210 = vunpack.c.l.b16 %v146
    %v211 = vunpack.c.l.b16 %v147
    %v212 = vunpack.c.l.b16 %v148
    %v213 = vunpack.c.l.b16 %v149
    %v214 = vunpack.c.l.b16 %v150
    %v215 = vunpack.c.l.b16 %v151
    %v216 = vunpack.c.l.b16 %v152
    %v217 = vunpack.c.l.b16 %v153
    %v218 = vpack.c.b16 %v211, %v210
    %v219 = vpack.c.b16 %v213, %v212
    %v220 = vpack.c.b16 %v215, %v214
    %v221 = vpack.c.b16 %v217, %v216
    %v223 = vsel %vm84, %v218, 0
    %v226 = vsel %vm84, %v219, 0
    %v229 = vsel %vm84, %v220, 0
    %v232 = vsel %vm84, %v221, 0
    %234 = vmatprep.subr.bf16.mxu0 0
    %235 = vmatpush1.bf16.msra.mxu0 %v144
    %236 = vmatprep.subr.bf16.mxu0 0
    %237 = vmatpush1.bf16.msra.mxu0 %v145
    %238 = vmatprep.subr.bf16.mxu0 0
    %239 = vmatpush1.bf16.msra.mxu0 0
    %240 = vmatprep.subr.bf16.mxu0 0
    %241 = vmatpush1.bf16.msra.mxu0 0
    %242 = vmatprep.subr.bf16.mxu0 0
    %243 = vmatpush1.bf16.msra.mxu0 0
    %244 = vmatprep.subr.bf16.mxu0 0
    %245 = vmatpush1.bf16.msra.mxu0 0
    %246 = vmatprep.subr.bf16.mxu0 0
    %247 = vmatpush1.bf16.msra.mxu0 0
    %248 = vmatprep.subr.bf16.mxu0 0
    %249 = vmatpush1.bf16.msra.mxu0 0
    %250 = vmatprep.subr.bf16.mxu0 0
    %251 = vmatpush1.bf16.msra.mxu0 0
    %252 = vmatprep.subr.bf16.mxu0 0
    %253 = vmatpush1.bf16.msra.mxu0 0
    %254 = vmatprep.subr.bf16.mxu0 0
    %255 = vmatpush1.bf16.msra.mxu0 0
    %256 = vmatprep.subr.bf16.mxu0 0
    %257 = vmatpush1.bf16.msra.mxu0 0
    %258 = vmatprep.subr.bf16.mxu0 0
    %259 = vmatpush1.bf16.msra.mxu0 0
    %260 = vmatprep.subr.bf16.mxu0 0
    %261 = vmatpush1.bf16.msra.mxu0 0
    %262 = vmatprep.subr.bf16.mxu0 0
    %263 = vmatpush1.bf16.msra.mxu0 0
    %264 = vmatprep.subr.bf16.mxu0 0
    %265 = vmatpush1.bf16.msra.mxu0 0
    %266 = vmatprep.mubr.bf16.mxu0 0
    %267 = vmatmul.mubr.bf16.gmra.mrb[0].mxu0 %v223
    %v268 = vpop.f32.mrb[0].mxu0
    %v269 = vadd.f32 %v165, %v268
    %v270 = vpop.f32.mrb[0].mxu0
    %v271 = vpop.f32.mrb[0].mxu0
    %v272 = vadd.f32 %v170, %v271
    %v273 = vpop.f32.mrb[0].mxu0
    %274 = vmatprep.mubr.bf16.mxu0 0
    %275 = vmatmul.mubr.bf16.gmra.mrb[0].mxu0 %v226
    %v276 = vpop.f32.mrb[0].mxu0
    %v277 = vadd.f32 %v175, %v276
    %v278 = vpop.f32.mrb[0].mxu0
    %v279 = vpop.f32.mrb[0].mxu0
    %v280 = vadd.f32 %v180, %v279
    %v281 = vpop.f32.mrb[0].mxu0
    %282 = vmatprep.mubr.bf16.mxu0 0
    %283 = vmatmul.mubr.bf16.gmra.mrb[0].mxu0 %v229
    %v284 = vpop.f32.mrb[0].mxu0
    %v285 = vadd.f32 %v185, %v284
    %v286 = vpop.f32.mrb[0].mxu0
    %v287 = vpop.f32.mrb[0].mxu0
    %v288 = vadd.f32 %v190, %v287
    %v289 = vpop.f32.mrb[0].mxu0
    %290 = vmatprep.mubr.bf16.mxu0 0
    %291 = vmatmul.mubr.bf16.gmra.mrb[0].mxu0 %v232
    %v292 = vpop.f32.mrb[0].mxu0
    %v293 = vadd.f32 %v195, %v292
    %v294 = vpop.f32.mrb[0].mxu0
    %v295 = vpop.f32.mrb[0].mxu0
    %v296 = vadd.f32 %v200, %v295
    %v297 = vpop.f32.mrb[0].mxu0
    %298 = vdwg.mxu0
    %v299 = vmax.f32 %v269, 0.0
    %v300 = vmax.f32 %v272, 0.0
    %v301 = vmax.f32 %v277, 0.0
    %v302 = vmax.f32 %v280, 0.0
    %v303 = vmax.f32 %v285, 0.0
    %v304 = vmax.f32 %v288, 0.0
    %v305 = vmax.f32 %v293, 0.0
    %v306 = vmax.f32 %v296, 0.0
    %v307 = vpack.c.bf16 %v300, %v299
    %v308 = vpack.c.bf16 %v302, %v301
    %v309 = vpack.c.bf16 %v304, %v303
    %v310 = vpack.c.bf16 %v306, %v305
    %v311 = vld [vmem:[%s1 + $0x60] sm:$0xf]
    %v312 = vld [vmem:[%s1 + $0x68] sm:$0xf]
    %v313 = vld [vmem:[%s1 + $0x70] sm:$0xf]
    %v314 = vld [vmem:[%s1 + $0x78] sm:$0xf]
    %v315 = vld [vmem:[%s1 + $0x80] sm:$0xf]
    %v316 = vld [vmem:[%s1 + $0x88] sm:$0xf]
    %v317 = vld [vmem:[%s1 + $0x90] sm:$0xf]
    %v318 = vld [vmem:[%s1 + $0x98] sm:$0xf]
    %v319 = vld [vmem:[%s1 + $0xa0] sm:$0xf]
    %v320 = vld [vmem:[%s1 + $0xa8] sm:$0xf]
    %v321 = vld [vmem:[%s1 + $0xb0] sm:$0xf]
    %v322 = vld [vmem:[%s1 + $0xb8] sm:$0xf]
    %v323 = vld [vmem:[%s1 + $0xc0] sm:$0xf]
    %v324 = vld [vmem:[%s1 + $0xc8] sm:$0xf]
    %v325 = vld [vmem:[%s1 + $0xd0] sm:$0xf]
    %v326 = vld [vmem:[%s1 + $0xd8] sm:$0xf]
    %v327 = vld [vmem:[%s2 + $0x60] sm:$0xff]
    %v328 = vld [vmem:[%s2 + $0x68] sm:$0xff]
    %v329 = vld [vmem:[%s2 + $0x70] sm:$0xff]
    %v330 = vld [vmem:[%s2 + $0x78] sm:$0xff]
    %v331 = vld [vmem:[%s2 + $0x80] sm:$0xff]
    %v332 = vld [vmem:[%s2 + $0x88] sm:$0xff]
    %v333 = vld [vmem:[%s2 + $0x90] sm:$0xff]
    %v334 = vld [vmem:[%s2 + $0x98] sm:$0xff]
    %v335 = vld [vmem:[%s2 + $0xa0] sm:$0xff]
    %v336 = vld [vmem:[%s2 + $0xa8] sm:$0xff]
    %v337 = vld [vmem:[%s2 + $0xb0] sm:$0xff]
    %v338 = vld [vmem:[%s2 + $0xb8] sm:$0xff]
    %v339 = vld [vmem:[%s2 + $0xc0] sm:$0xff]
    %v340 = vld [vmem:[%s2 + $0xc8] sm:$0xff]
    %v341 = vld [vmem:[%s2 + $0xd0] sm:$0xff]
    %v342 = vld [vmem:[%s2 + $0xd8] sm:$0xff]
    %344 = vset.pattern.permute.xlu0 0
    %345 = vperm.xlu0 %344, %v327
    %v346 = vpop.permute.xlu0 %345
    %349 = vset.pattern.permute.xlu0 0
    %350 = vperm.xlu0 %349, %v328
    %v351 = vpop.permute.xlu0 %350
    %354 = vset.pattern.permute.xlu0 0
    %355 = vperm.xlu0 %354, %v329
    %v356 = vpop.permute.xlu0 %355
    %359 = vset.pattern.permute.xlu0 0
    %360 = vperm.xlu0 %359, %v330
    %v361 = vpop.permute.xlu0 %360
    %364 = vset.pattern.permute.xlu0 0
    %365 = vperm.xlu0 %364, %v331
    %v366 = vpop.permute.xlu0 %365
    %369 = vset.pattern.permute.xlu0 0
    %370 = vperm.xlu0 %369, %v332
    %v371 = vpop.permute.xlu0 %370
    %374 = vset.pattern.permute.xlu0 0
    %375 = vperm.xlu0 %374, %v333
    %v376 = vpop.permute.xlu0 %375
    %379 = vset.pattern.permute.xlu0 0
    %380 = vperm.xlu0 %379, %v334
    %v381 = vpop.permute.xlu0 %380
    %384 = vset.pattern.permute.xlu0 0
    %385 = vperm.xlu0 %384, %v335
    %v386 = vpop.permute.xlu0 %385
    %389 = vset.pattern.permute.xlu0 0
    %390 = vperm.xlu0 %389, %v336
    %v391 = vpop.permute.xlu0 %390
    %394 = vset.pattern.permute.xlu0 0
    %395 = vperm.xlu0 %394, %v337
    %v396 = vpop.permute.xlu0 %395
    %399 = vset.pattern.permute.xlu0 0
    %400 = vperm.xlu0 %399, %v338
    %v401 = vpop.permute.xlu0 %400
    %404 = vset.pattern.permute.xlu0 0
    %405 = vperm.xlu0 %404, %v339
    %v406 = vpop.permute.xlu0 %405
    %409 = vset.pattern.permute.xlu0 0
    %410 = vperm.xlu0 %409, %v340
    %v411 = vpop.permute.xlu0 %410
    %414 = vset.pattern.permute.xlu0 0
    %415 = vperm.xlu0 %414, %v341
    %v416 = vpop.permute.xlu0 %415
    %419 = vset.pattern.permute.xlu0 0
    %420 = vperm.xlu0 %419, %v342
    %v421 = vpop.permute.xlu0 %420
    %v439 = vunpack.c.l.b16 %v311
    %v440 = vunpack.c.l.b16 %v312
    %v441 = vunpack.c.l.b16 %v313
    %v442 = vunpack.c.l.b16 %v314
    %v443 = vunpack.c.l.b16 %v315
    %v444 = vunpack.c.l.b16 %v316
    %v445 = vunpack.c.l.b16 %v317
    %v446 = vunpack.c.l.b16 %v318
    %v447 = vunpack.c.l.b16 %v319
    %v448 = vunpack.c.l.b16 %v320
    %v449 = vunpack.c.l.b16 %v321
    %v450 = vunpack.c.l.b16 %v322
    %v451 = vunpack.c.l.b16 %v323
    %v452 = vunpack.c.l.b16 %v324
    %v453 = vunpack.c.l.b16 %v325
    %v454 = vunpack.c.l.b16 %v326
    %v455 = vpack.c.b16 %v440, %v439
    %v456 = vpack.c.b16 %v442, %v441
    %v457 = vpack.c.b16 %v444, %v443
    %v458 = vpack.c.b16 %v446, %v445
    %v459 = vpack.c.b16 %v448, %v447
    %v460 = vpack.c.b16 %v450, %v449
    %v461 = vpack.c.b16 %v452, %v451
    %v462 = vpack.c.b16 %v454, %v453
    %vm463 = vcmask 523264
    %v465 = vsel %vm463, %v455, 0
    %v468 = vsel %vm463, %v456, 0
    %v471 = vsel %vm463, %v457, 0
    %v474 = vsel %vm463, %v458, 0
    %v477 = vsel %vm463, %v459, 0
    %v480 = vsel %vm463, %v460, 0
    %v483 = vsel %vm463, %v461, 0
    %v486 = vsel %vm463, %v462, 0
    %488 = vmatprep.subr.bf16.mxu0 0
    %489 = vmatpush1.bf16.msra.mxu0 %v307
    %490 = vmatprep.subr.bf16.mxu0 0
    %491 = vmatpush1.bf16.msra.mxu0 %v308
    %492 = vmatprep.subr.bf16.mxu0 0
    %493 = vmatpush1.bf16.msra.mxu0 %v309
    %494 = vmatprep.subr.bf16.mxu0 0
    %495 = vmatpush1.bf16.msra.mxu0 %v310
    %496 = vmatprep.subr.bf16.mxu0 0
    %497 = vmatpush1.bf16.msra.mxu0 0
    %498 = vmatprep.subr.bf16.mxu0 0
    %499 = vmatpush1.bf16.msra.mxu0 0
    %500 = vmatprep.subr.bf16.mxu0 0
    %501 = vmatpush1.bf16.msra.mxu0 0
    %502 = vmatprep.subr.bf16.mxu0 0
    %503 = vmatpush1.bf16.msra.mxu0 0
    %504 = vmatprep.subr.bf16.mxu0 0
    %505 = vmatpush1.bf16.msra.mxu0 0
    %506 = vmatprep.subr.bf16.mxu0 0
    %507 = vmatpush1.bf16.msra.mxu0 0
    %508 = vmatprep.subr.bf16.mxu0 0
    %509 = vmatpush1.bf16.msra.mxu0 0
    %510 = vmatprep.subr.bf16.mxu0 0
    %511 = vmatpush1.bf16.msra.mxu0 0
    %512 = vmatprep.subr.bf16.mxu0 0
    %513 = vmatpush1.bf16.msra.mxu0 0
    %514 = vmatprep.subr.bf16.mxu0 0
    %515 = vmatpush1.bf16.msra.mxu0 0
    %516 = vmatprep.subr.bf16.mxu0 0
    %517 = vmatpush1.bf16.msra.mxu0 0
    %518 = vmatprep.subr.bf16.mxu0 0
    %519 = vmatpush1.bf16.msra.mxu0 0
    %520 = vmatprep.mubr.bf16.mxu0 0
    %521 = vmatmul.mubr.bf16.gmra.mrb[0].mxu0 %v465
    %v522 = vpop.f32.mrb[0].mxu0
    %v523 = vadd.f32 %v346, %v522
    %v524 = vpop.f32.mrb[0].mxu0
    %v525 = vpop.f32.mrb[0].mxu0
    %v526 = vadd.f32 %v351, %v525
    %v527 = vpop.f32.mrb[0].mxu0
    %528 = vmatprep.mubr.bf16.mxu0 0
    %529 = vmatmul.mubr.bf16.gmra.mrb[0].mxu0 %v468
    %v530 = vpop.f32.mrb[0].mxu0
    %v531 = vadd.f32 %v356, %v530
    %v532 = vpop.f32.mrb[0].mxu0
    %v533 = vpop.f32.mrb[0].mxu0
    %v534 = vadd.f32 %v361, %v533
    %v535 = vpop.f32.mrb[0].mxu0
    %536 = vmatprep.mubr.bf16.mxu0 0
    %537 = vmatmul.mubr.bf16.gmra.mrb[0].mxu0 %v471
    %v538 = vpop.f32.mrb[0].mxu0
    %v539 = vadd.f32 %v366, %v538
    %v540 = vpop.f32.mrb[0].mxu0
    %v541 = vpop.f32.mrb[0].mxu0
    %v542 = vadd.f32 %v371, %v541
    %v543 = vpop.f32.mrb[0].mxu0
    %544 = vmatprep.mubr.bf16.mxu0 0
    %545 = vmatmul.mubr.bf16.gmra.mrb[0].mxu0 %v474
    %v546 = vpop.f32.mrb[0].mxu0
    %v547 = vadd.f32 %v376, %v546
    %v548 = vpop.f32.mrb[0].mxu0
    %v549 = vpop.f32.mrb[0].mxu0
    %v550 = vadd.f32 %v381, %v549
    %v551 = vpop.f32.mrb[0].mxu0
    %552 = vmatprep.mubr.bf16.mxu0 0
    %553 = vmatmul.mubr.bf16.gmra.mrb[0].mxu0 %v477
    %v554 = vpop.f32.mrb[0].mxu0
    %v555 = vadd.f32 %v386, %v554
    %v556 = vpop.f32.mrb[0].mxu0
    %v557 = vpop.f32.mrb[0].mxu0
    %v558 = vadd.f32 %v391, %v557
    %v559 = vpop.f32.mrb[0].mxu0
    %560 = vmatprep.mubr.bf16.mxu0 0
    %561 = vmatmul.mubr.bf16.gmra.mrb[0].mxu0 %v480
    %v562 = vpop.f32.mrb[0].mxu0
    %v563 = vadd.f32 %v396, %v562
    %v564 = vpop.f32.mrb[0].mxu0
    %v565 = vpop.f32.mrb[0].mxu0
    %v566 = vadd.f32 %v401, %v565
    %v567 = vpop.f32.mrb[0].mxu0
    %568 = vmatprep.mubr.bf16.mxu0 0
    %569 = vmatmul.mubr.bf16.gmra.mrb[0].mxu0 %v483
    %v570 = vpop.f32.mrb[0].mxu0
    %v571 = vadd.f32 %v406, %v570
    %v572 = vpop.f32.mrb[0].mxu0
    %v573 = vpop.f32.mrb[0].mxu0
    %v574 = vadd.f32 %v411, %v573
    %v575 = vpop.f32.mrb[0].mxu0
    %576 = vmatprep.mubr.bf16.mxu0 0
    %577 = vmatmul.mubr.bf16.gmra.mrb[0].mxu0 %v486
    %v578 = vpop.f32.mrb[0].mxu0
    %v579 = vadd.f32 %v416, %v578
    %v580 = vpop.f32.mrb[0].mxu0
    %v581 = vpop.f32.mrb[0].mxu0
    %v582 = vadd.f32 %v421, %v581
    %v583 = vpop.f32.mrb[0].mxu0
    %584 = vdwg.mxu0
    %v585 = vmax.f32 %v523, 0.0
    %v586 = vmax.f32 %v526, 0.0
    %v587 = vmax.f32 %v531, 0.0
    %v588 = vmax.f32 %v534, 0.0
    %v589 = vmax.f32 %v539, 0.0
    %v590 = vmax.f32 %v542, 0.0
    %v591 = vmax.f32 %v547, 0.0
    %v592 = vmax.f32 %v550, 0.0
    %v593 = vmax.f32 %v555, 0.0
    %v594 = vmax.f32 %v558, 0.0
    %v595 = vmax.f32 %v563, 0.0
    %v596 = vmax.f32 %v566, 0.0
    %v597 = vmax.f32 %v571, 0.0
    %v598 = vmax.f32 %v574, 0.0
    %v599 = vmax.f32 %v579, 0.0
    %v600 = vmax.f32 %v582, 0.0
    %v601 = vpack.c.bf16 %v586, %v585
    %v602 = vpack.c.bf16 %v588, %v587
    %v603 = vpack.c.bf16 %v590, %v589
    %v604 = vpack.c.bf16 %v592, %v591
    %v605 = vpack.c.bf16 %v594, %v593
    %v606 = vpack.c.bf16 %v596, %v595
    %v607 = vpack.c.bf16 %v598, %v597
    %v608 = vpack.c.bf16 %v600, %v599
    %v609 = vld [vmem:[%s1 + $0xe0] sm:$0xf]
    %v610 = vld [vmem:[%s1 + $0xe8] sm:$0xf]
    %v611 = vld [vmem:[%s1 + $0xf0] sm:$0xf]
    %v612 = vld [vmem:[%s1 + $0xf8] sm:$0xf]
    %v613 = vld [vmem:[%s1 + $0x100] sm:$0xf]
    %v614 = vld [vmem:[%s1 + $0x108] sm:$0xf]
    %v615 = vld [vmem:[%s1 + $0x110] sm:$0xf]
    %v616 = vld [vmem:[%s1 + $0x118] sm:$0xf]
    %v617 = vld [vmem:[%s1 + $0x120] sm:$0xf]
    %v618 = vld [vmem:[%s1 + $0x128] sm:$0xf]
    %v619 = vld [vmem:[%s1 + $0x130] sm:$0xf]
    %v620 = vld [vmem:[%s1 + $0x138] sm:$0xf]
    %v621 = vld [vmem:[%s1 + $0x140] sm:$0xf]
    %v622 = vld [vmem:[%s1 + $0x148] sm:$0xf]
    %v623 = vld [vmem:[%s1 + $0x150] sm:$0xf]
    %v624 = vld [vmem:[%s1 + $0x158] sm:$0xf]
    %v625 = vld [vmem:[%s1 + $0x160] sm:$0xf]
    %v626 = vld [vmem:[%s1 + $0x168] sm:$0xf]
    %v627 = vld [vmem:[%s1 + $0x170] sm:$0xf]
    %v628 = vld [vmem:[%s1 + $0x178] sm:$0xf]
    %v629 = vld [vmem:[%s1 + $0x180] sm:$0xf]
    %v630 = vld [vmem:[%s1 + $0x188] sm:$0xf]
    %v631 = vld [vmem:[%s1 + $0x190] sm:$0xf]
    %v632 = vld [vmem:[%s1 + $0x198] sm:$0xf]
    %v633 = vld [vmem:[%s1 + $0x1a0] sm:$0xf]
    %v634 = vld [vmem:[%s1 + $0x1a8] sm:$0xf]
    %v635 = vld [vmem:[%s1 + $0x1b0] sm:$0xf]
    %v636 = vld [vmem:[%s1 + $0x1b8] sm:$0xf]
    %v637 = vld [vmem:[%s1 + $0x1c0] sm:$0xf]
    %v638 = vld [vmem:[%s1 + $0x1c8] sm:$0xf]
    %v639 = vld [vmem:[%s1 + $0x1d0] sm:$0xf]
    %v640 = vld [vmem:[%s1 + $0x1d8] sm:$0xf]
    %v641 = vld [vmem:[%s2 + $0xe0] sm:$0xff]
    %v642 = vld [vmem:[%s2 + $0xe8] sm:$0xff]
    %v643 = vld [vmem:[%s2 + $0xf0] sm:$0xff]
    %v644 = vld [vmem:[%s2 + $0xf8] sm:$0xff]
    %v645 = vld [vmem:[%s2 + $0x100] sm:$0xff]
    %v646 = vld [vmem:[%s2 + $0x108] sm:$0xff]
    %v647 = vld [vmem:[%s2 + $0x110] sm:$0xff]
    %v648 = vld [vmem:[%s2 + $0x118] sm:$0xff]
    %v649 = vld [vmem:[%s2 + $0x120] sm:$0xff]
    %v650 = vld [vmem:[%s2 + $0x128] sm:$0xff]
    %v651 = vld [vmem:[%s2 + $0x130] sm:$0xff]
    %v652 = vld [vmem:[%s2 + $0x138] sm:$0xff]
    %v653 = vld [vmem:[%s2 + $0x140] sm:$0xff]
    %v654 = vld [vmem:[%s2 + $0x148] sm:$0xff]
    %v655 = vld [vmem:[%s2 + $0x150] sm:$0xff]
    %v656 = vld [vmem:[%s2 + $0x158] sm:$0xff]
    %v657 = vld [vmem:[%s2 + $0x160] sm:$0xff]
    %v658 = vld [vmem:[%s2 + $0x168] sm:$0xff]
    %v659 = vld [vmem:[%s2 + $0x170] sm:$0xff]
    %v660 = vld [vmem:[%s2 + $0x178] sm:$0xff]
    %v661 = vld [vmem:[%s2 + $0x180] sm:$0xff]
    %v662 = vld [vmem:[%s2 + $0x188] sm:$0xff]
    %v663 = vld [vmem:[%s2 + $0x190] sm:$0xff]
    %v664 = vld [vmem:[%s2 + $0x198] sm:$0xff]
    %v665 = vld [vmem:[%s2 + $0x1a0] sm:$0xff]
    %v666 = vld [vmem:[%s2 + $0x1a8] sm:$0xff]
    %v667 = vld [vmem:[%s2 + $0x1b0] sm:$0xff]
    %v668 = vld [vmem:[%s2 + $0x1b8] sm:$0xff]
    %v669 = vld [vmem:[%s2 + $0x1c0] sm:$0xff]
    %v670 = vld [vmem:[%s2 + $0x1c8] sm:$0xff]
    %v671 = vld [vmem:[%s2 + $0x1d0] sm:$0xff]
    %v672 = vld [vmem:[%s2 + $0x1d8] sm:$0xff]
    %674 = vset.pattern.permute.xlu0 0
    %675 = vperm.xlu0 %674, %v641
    %v676 = vpop.permute.xlu0 %675
    %679 = vset.pattern.permute.xlu0 0
    %680 = vperm.xlu0 %679, %v642
    %v681 = vpop.permute.xlu0 %680
    %684 = vset.pattern.permute.xlu0 0
    %685 = vperm.xlu0 %684, %v643
    %v686 = vpop.permute.xlu0 %685
    %689 = vset.pattern.permute.xlu0 0
    %690 = vperm.xlu0 %689, %v644
    %v691 = vpop.permute.xlu0 %690
    %694 = vset.pattern.permute.xlu0 0
    %695 = vperm.xlu0 %694, %v645
    %v696 = vpop.permute.xlu0 %695
    %699 = vset.pattern.permute.xlu0 0
    %700 = vperm.xlu0 %699, %v646
    %v701 = vpop.permute.xlu0 %700
    %704 = vset.pattern.permute.xlu0 0
    %705 = vperm.xlu0 %704, %v647
    %v706 = vpop.permute.xlu0 %705
    %709 = vset.pattern.permute.xlu0 0
    %710 = vperm.xlu0 %709, %v648
    %v711 = vpop.permute.xlu0 %710
    %714 = vset.pattern.permute.xlu0 0
    %715 = vperm.xlu0 %714, %v649
    %v716 = vpop.permute.xlu0 %715
    %719 = vset.pattern.permute.xlu0 0
    %720 = vperm.xlu0 %719, %v650
    %v721 = vpop.permute.xlu0 %720
    %724 = vset.pattern.permute.xlu0 0
    %725 = vperm.xlu0 %724, %v651
    %v726 = vpop.permute.xlu0 %725
    %729 = vset.pattern.permute.xlu0 0
    %730 = vperm.xlu0 %729, %v652
    %v731 = vpop.permute.xlu0 %730
    %734 = vset.pattern.permute.xlu0 0
    %735 = vperm.xlu0 %734, %v653
    %v736 = vpop.permute.xlu0 %735
    %739 = vset.pattern.permute.xlu0 0
    %740 = vperm.xlu0 %739, %v654
    %v741 = vpop.permute.xlu0 %740
    %744 = vset.pattern.permute.xlu0 0
    %745 = vperm.xlu0 %744, %v655
    %v746 = vpop.permute.xlu0 %745
    %749 = vset.pattern.permute.xlu0 0
    %750 = vperm.xlu0 %749, %v656
    %v751 = vpop.permute.xlu0 %750
    %754 = vset.pattern.permute.xlu0 0
    %755 = vperm.xlu0 %754, %v657
    %v756 = vpop.permute.xlu0 %755
    %759 = vset.pattern.permute.xlu0 0
    %760 = vperm.xlu0 %759, %v658
    %v761 = vpop.permute.xlu0 %760
    %764 = vset.pattern.permute.xlu0 0
    %765 = vperm.xlu0 %764, %v659
    %v766 = vpop.permute.xlu0 %765
    %769 = vset.pattern.permute.xlu0 0
    %770 = vperm.xlu0 %769, %v660
    %v771 = vpop.permute.xlu0 %770
    %774 = vset.pattern.permute.xlu0 0
    %775 = vperm.xlu0 %774, %v661
    %v776 = vpop.permute.xlu0 %775
    %779 = vset.pattern.permute.xlu0 0
    %780 = vperm.xlu0 %779, %v662
    %v781 = vpop.permute.xlu0 %780
    %784 = vset.pattern.permute.xlu0 0
    %785 = vperm.xlu0 %784, %v663
    %v786 = vpop.permute.xlu0 %785
    %789 = vset.pattern.permute.xlu0 0
    %790 = vperm.xlu0 %789, %v664
    %v791 = vpop.permute.xlu0 %790
    %794 = vset.pattern.permute.xlu0 0
    %795 = vperm.xlu0 %794, %v665
    %v796 = vpop.permute.xlu0 %795
    %799 = vset.pattern.permute.xlu0 0
    %800 = vperm.xlu0 %799, %v666
    %v801 = vpop.permute.xlu0 %800
    %804 = vset.pattern.permute.xlu0 0
    %805 = vperm.xlu0 %804, %v667
    %v806 = vpop.permute.xlu0 %805
    %809 = vset.pattern.permute.xlu0 0
    %810 = vperm.xlu0 %809, %v668
    %v811 = vpop.permute.xlu0 %810
    %814 = vset.pattern.permute.xlu0 0
    %815 = vperm.xlu0 %814, %v669
    %v816 = vpop.permute.xlu0 %815
    %819 = vset.pattern.permute.xlu0 0
    %820 = vperm.xlu0 %819, %v670
    %v821 = vpop.permute.xlu0 %820
    %824 = vset.pattern.permute.xlu0 0
    %825 = vperm.xlu0 %824, %v671
    %v826 = vpop.permute.xlu0 %825
    %829 = vset.pattern.permute.xlu0 0
    %830 = vperm.xlu0 %829, %v672
    %v831 = vpop.permute.xlu0 %830
    %v865 = vunpack.c.l.b16 %v609
    %v866 = vunpack.c.l.b16 %v610
    %v867 = vunpack.c.l.b16 %v611
    %v868 = vunpack.c.l.b16 %v612
    %v869 = vunpack.c.l.b16 %v613
    %v870 = vunpack.c.l.b16 %v614
    %v871 = vunpack.c.l.b16 %v615
    %v872 = vunpack.c.l.b16 %v616
    %v873 = vunpack.c.l.b16 %v617
    %v874 = vunpack.c.l.b16 %v618
    %v875 = vunpack.c.l.b16 %v619
    %v876 = vunpack.c.l.b16 %v620
    %v877 = vunpack.c.l.b16 %v621
    %v878 = vunpack.c.l.b16 %v622
    %v879 = vunpack.c.l.b16 %v623
    %v880 = vunpack.c.l.b16 %v624
    %v881 = vunpack.c.l.b16 %v625
    %v882 = vunpack.c.l.b16 %v626
    %v883 = vunpack.c.l.b16 %v627
    %v884 = vunpack.c.l.b16 %v628
    %v885 = vunpack.c.l.b16 %v629
    %v886 = vunpack.c.l.b16 %v630
    %v887 = vunpack.c.l.b16 %v631
    %v888 = vunpack.c.l.b16 %v632
    %v889 = vunpack.c.l.b16 %v633
    %v890 = vunpack.c.l.b16 %v634
    %v891 = vunpack.c.l.b16 %v635
    %v892 = vunpack.c.l.b16 %v636
    %v893 = vunpack.c.l.b16 %v637
    %v894 = vunpack.c.l.b16 %v638
    %v895 = vunpack.c.l.b16 %v639
    %v896 = vunpack.c.l.b16 %v640
    %v897 = vpack.c.b16 %v866, %v865
    %v898 = vpack.c.b16 %v868, %v867
    %v899 = vpack.c.b16 %v870, %v869
    %v900 = vpack.c.b16 %v872, %v871
    %v901 = vpack.c.b16 %v874, %v873
    %v902 = vpack.c.b16 %v876, %v875
    %v903 = vpack.c.b16 %v878, %v877
    %v904 = vpack.c.b16 %v880, %v879
    %v905 = vpack.c.b16 %v882, %v881
    %v906 = vpack.c.b16 %v884, %v883
    %v907 = vpack.c.b16 %v886, %v885
    %v908 = vpack.c.b16 %v888, %v887
    %v909 = vpack.c.b16 %v890, %v889
    %v910 = vpack.c.b16 %v892, %v891
    %v911 = vpack.c.b16 %v894, %v893
    %v912 = vpack.c.b16 %v896, %v895
    %929 = vmatprep.subr.bf16.mxu0 0
    %930 = vmatpush1.bf16.msra.mxu0 %v601
    %931 = vmatprep.subr.bf16.mxu0 0
    %932 = vmatpush1.bf16.msra.mxu0 %v602
    %933 = vmatprep.subr.bf16.mxu0 0
    %934 = vmatpush1.bf16.msra.mxu0 %v603
    %935 = vmatprep.subr.bf16.mxu0 0
    %936 = vmatpush1.bf16.msra.mxu0 %v604
    %937 = vmatprep.subr.bf16.mxu0 0
    %938 = vmatpush1.bf16.msra.mxu0 %v605
    %939 = vmatprep.subr.bf16.mxu0 0
    %940 = vmatpush1.bf16.msra.mxu0 %v606
    %941 = vmatprep.subr.bf16.mxu0 0
    %942 = vmatpush1.bf16.msra.mxu0 %v607
    %943 = vmatprep.subr.bf16.mxu0 0
    %944 = vmatpush1.bf16.msra.mxu0 %v608
    %945 = vmatprep.subr.bf16.mxu0 0
    %946 = vmatpush1.bf16.msra.mxu0 0
    %947 = vmatprep.subr.bf16.mxu0 0
    %948 = vmatpush1.bf16.msra.mxu0 0
    %949 = vmatprep.subr.bf16.mxu0 0
    %950 = vmatpush1.bf16.msra.mxu0 0
    %951 = vmatprep.subr.bf16.mxu0 0
    %952 = vmatpush1.bf16.msra.mxu0 0
    %953 = vmatprep.subr.bf16.mxu0 0
    %954 = vmatpush1.bf16.msra.mxu0 0
    %955 = vmatprep.subr.bf16.mxu0 0
    %956 = vmatpush1.bf16.msra.mxu0 0
    %957 = vmatprep.subr.bf16.mxu0 0
    %958 = vmatpush1.bf16.msra.mxu0 0
    %959 = vmatprep.subr.bf16.mxu0 0
    %960 = vmatpush1.bf16.msra.mxu0 0
    %961 = vmatprep.mubr.bf16.mxu0 0
    %962 = vmatmul.mubr.bf16.gmra.mrb[0].mxu0 %v897
    %v963 = vpop.f32.mrb[0].mxu0
    %v964 = vadd.f32 %v676, %v963
    %v965 = vpop.f32.mrb[0].mxu0
    %v966 = vpop.f32.mrb[0].mxu0
    %v967 = vadd.f32 %v681, %v966
    %v968 = vpop.f32.mrb[0].mxu0
    %969 = vmatprep.mubr.bf16.mxu0 0
    %970 = vmatmul.mubr.bf16.gmra.mrb[0].mxu0 %v898
    %v971 = vpop.f32.mrb[0].mxu0
    %v972 = vadd.f32 %v686, %v971
    %v973 = vpop.f32.mrb[0].mxu0
    %v974 = vpop.f32.mrb[0].mxu0
    %v975 = vadd.f32 %v691, %v974
    %v976 = vpop.f32.mrb[0].mxu0
    %977 = vmatprep.mubr.bf16.mxu0 0
    %978 = vmatmul.mubr.bf16.gmra.mrb[0].mxu0 %v899
    %v979 = vpop.f32.mrb[0].mxu0
    %v980 = vadd.f32 %v696, %v979
    %v981 = vpop.f32.mrb[0].mxu0
    %v982 = vpop.f32.mrb[0].mxu0
    %v983 = vadd.f32 %v701, %v982
    %v984 = vpop.f32.mrb[0].mxu0
    %985 = vmatprep.mubr.bf16.mxu0 0
    %986 = vmatmul.mubr.bf16.gmra.mrb[0].mxu0 %v900
    %v987 = vpop.f32.mrb[0].mxu0
    %v988 = vadd.f32 %v706, %v987
    %v989 = vpop.f32.mrb[0].mxu0
    %v990 = vpop.f32.mrb[0].mxu0
    %v991 = vadd.f32 %v711, %v990
    %v992 = vpop.f32.mrb[0].mxu0
    %993 = vmatprep.mubr.bf16.mxu0 0
    %994 = vmatmul.mubr.bf16.gmra.mrb[0].mxu0 %v901
    %v995 = vpop.f32.mrb[0].mxu0
    %v996 = vadd.f32 %v716, %v995
    %v997 = vpop.f32.mrb[0].mxu0
    %v998 = vpop.f32.mrb[0].mxu0
    %v999 = vadd.f32 %v721, %v998
    %v1000 = vpop.f32.mrb[0].mxu0
    %1001 = vmatprep.mubr.bf16.mxu0 0
    %1002 = vmatmul.mubr.bf16.gmra.mrb[0].mxu0 %v902
    %v1003 = vpop.f32.mrb[0].mxu0
    %v1004 = vadd.f32 %v726, %v1003
    %v1005 = vpop.f32.mrb[0].mxu0
    %v1006 = vpop.f32.mrb[0].mxu0
    %v1007 = vadd.f32 %v731, %v1006
    %v1008 = vpop.f32.mrb[0].mxu0
    %1009 = vmatprep.mubr.bf16.mxu0 0
    %1010 = vmatmul.mubr.bf16.gmra.mrb[0].mxu0 %v903
    %v1011 = vpop.f32.mrb[0].mxu0
    %v1012 = vadd.f32 %v736, %v1011
    %v1013 = vpop.f32.mrb[0].mxu0
    %v1014 = vpop.f32.mrb[0].mxu0
    %v1015 = vadd.f32 %v741, %v1014
    %v1016 = vpop.f32.mrb[0].mxu0
    %1017 = vmatprep.mubr.bf16.mxu0 0
    %1018 = vmatmul.mubr.bf16.gmra.mrb[0].mxu0 %v904
    %v1019 = vpop.f32.mrb[0].mxu0
    %v1020 = vadd.f32 %v746, %v1019
    %v1021 = vpop.f32.mrb[0].mxu0
    %v1022 = vpop.f32.mrb[0].mxu0
    %v1023 = vadd.f32 %v751, %v1022
    %v1024 = vpop.f32.mrb[0].mxu0
    %1025 = vmatprep.mubr.bf16.mxu0 0
    %1026 = vmatmul.mubr.bf16.gmra.mrb[0].mxu0 %v905
    %v1027 = vpop.f32.mrb[0].mxu0
    %v1028 = vadd.f32 %v756, %v1027
    %v1029 = vpop.f32.mrb[0].mxu0
    %v1030 = vpop.f32.mrb[0].mxu0
    %v1031 = vadd.f32 %v761, %v1030
    %v1032 = vpop.f32.mrb[0].mxu0
    %1033 = vmatprep.mubr.bf16.mxu0 0
    %1034 = vmatmul.mubr.bf16.gmra.mrb[0].mxu0 %v906
    %v1035 = vpop.f32.mrb[0].mxu0
    %v1036 = vadd.f32 %v766, %v1035
    %v1037 = vpop.f32.mrb[0].mxu0
    %v1038 = vpop.f32.mrb[0].mxu0
    %v1039 = vadd.f32 %v771, %v1038
    %v1040 = vpop.f32.mrb[0].mxu0
    %1041 = vmatprep.mubr.bf16.mxu0 0
    %1042 = vmatmul.mubr.bf16.gmra.mrb[0].mxu0 %v907
    %v1043 = vpop.f32.mrb[0].mxu0
    %v1044 = vadd.f32 %v776, %v1043
    %v1045 = vpop.f32.mrb[0].mxu0
    %v1046 = vpop.f32.mrb[0].mxu0
    %v1047 = vadd.f32 %v781, %v1046
    %v1048 = vpop.f32.mrb[0].mxu0
    %1049 = vmatprep.mubr.bf16.mxu0 0
    %1050 = vmatmul.mubr.bf16.gmra.mrb[0].mxu0 %v908
    %v1051 = vpop.f32.mrb[0].mxu0
    %v1052 = vadd.f32 %v786, %v1051
    %v1053 = vpop.f32.mrb[0].mxu0
    %v1054 = vpop.f32.mrb[0].mxu0
    %v1055 = vadd.f32 %v791, %v1054
    %v1056 = vpop.f32.mrb[0].mxu0
    %1057 = vmatprep.mubr.bf16.mxu0 0
    %1058 = vmatmul.mubr.bf16.gmra.mrb[0].mxu0 %v909
    %v1059 = vpop.f32.mrb[0].mxu0
    %v1060 = vadd.f32 %v796, %v1059
    %v1061 = vpop.f32.mrb[0].mxu0
    %v1062 = vpop.f32.mrb[0].mxu0
    %v1063 = vadd.f32 %v801, %v1062
    %v1064 = vpop.f32.mrb[0].mxu0
    %1065 = vmatprep.mubr.bf16.mxu0 0
    %1066 = vmatmul.mubr.bf16.gmra.mrb[0].mxu0 %v910
    %v1067 = vpop.f32.mrb[0].mxu0
    %v1068 = vadd.f32 %v806, %v1067
    %v1069 = vpop.f32.mrb[0].mxu0
    %v1070 = vpop.f32.mrb[0].mxu0
    %v1071 = vadd.f32 %v811, %v1070
    %v1072 = vpop.f32.mrb[0].mxu0
    %1073 = vmatprep.mubr.bf16.mxu0 0
    %1074 = vmatmul.mubr.bf16.gmra.mrb[0].mxu0 %v911
    %v1075 = vpop.f32.mrb[0].mxu0
    %v1076 = vadd.f32 %v816, %v1075
    %v1077 = vpop.f32.mrb[0].mxu0
    %v1078 = vpop.f32.mrb[0].mxu0
    %v1079 = vadd.f32 %v821, %v1078
    %v1080 = vpop.f32.mrb[0].mxu0
    %1081 = vmatprep.mubr.bf16.mxu0 0
    %1082 = vmatmul.mubr.bf16.gmra.mrb[0].mxu0 %v912
    %v1083 = vpop.f32.mrb[0].mxu0
    %v1084 = vadd.f32 %v826, %v1083
    %v1085 = vpop.f32.mrb[0].mxu0
    %v1086 = vpop.f32.mrb[0].mxu0
    %v1087 = vadd.f32 %v831, %v1086
    %v1088 = vpop.f32.mrb[0].mxu0
    %1089 = vdwg.mxu0
    %v1090 = vmax.f32 %v964, 0.0
    %v1091 = vmax.f32 %v967, 0.0
    %v1092 = vmax.f32 %v972, 0.0
    %v1093 = vmax.f32 %v975, 0.0
    %v1094 = vmax.f32 %v980, 0.0
    %v1095 = vmax.f32 %v983, 0.0
    %v1096 = vmax.f32 %v988, 0.0
    %v1097 = vmax.f32 %v991, 0.0
    %v1098 = vmax.f32 %v996, 0.0
    %v1099 = vmax.f32 %v999, 0.0
    %v1100 = vmax.f32 %v1004, 0.0
    %v1101 = vmax.f32 %v1007, 0.0
    %v1102 = vmax.f32 %v1012, 0.0
    %v1103 = vmax.f32 %v1015, 0.0
    %v1104 = vmax.f32 %v1020, 0.0
    %v1105 = vmax.f32 %v1023, 0.0
    %v1106 = vmax.f32 %v1028, 0.0
    %v1107 = vmax.f32 %v1031, 0.0
    %v1108 = vmax.f32 %v1036, 0.0
    %v1109 = vmax.f32 %v1039, 0.0
    %v1110 = vmax.f32 %v1044, 0.0
    %v1111 = vmax.f32 %v1047, 0.0
    %v1112 = vmax.f32 %v1052, 0.0
    %v1113 = vmax.f32 %v1055, 0.0
    %v1114 = vmax.f32 %v1060, 0.0
    %v1115 = vmax.f32 %v1063, 0.0
    %v1116 = vmax.f32 %v1068, 0.0
    %v1117 = vmax.f32 %v1071, 0.0
    %v1118 = vmax.f32 %v1076, 0.0
    %v1119 = vmax.f32 %v1079, 0.0
    %v1120 = vmax.f32 %v1084, 0.0
    %v1121 = vmax.f32 %v1087, 0.0
    %v1122 = vpack.c.bf16 %v1091, %v1090
    %v1123 = vpack.c.bf16 %v1093, %v1092
    %v1124 = vpack.c.bf16 %v1095, %v1094
    %v1125 = vpack.c.bf16 %v1097, %v1096
    %v1126 = vpack.c.bf16 %v1099, %v1098
    %v1127 = vpack.c.bf16 %v1101, %v1100
    %v1128 = vpack.c.bf16 %v1103, %v1102
    %v1129 = vpack.c.bf16 %v1105, %v1104
    %v1130 = vpack.c.bf16 %v1107, %v1106
    %v1131 = vpack.c.bf16 %v1109, %v1108
    %v1132 = vpack.c.bf16 %v1111, %v1110
    %v1133 = vpack.c.bf16 %v1113, %v1112
    %v1134 = vpack.c.bf16 %v1115, %v1114
    %v1135 = vpack.c.bf16 %v1117, %v1116
    %v1136 = vpack.c.bf16 %v1119, %v1118
    %v1137 = vpack.c.bf16 %v1121, %v1120
    %v1138 = vld [vmem:[%s1 + $0x1e0] sm:$0xff]
    %v1139 = vld [vmem:[%s1 + $0x1e8] sm:$0xff]
    %v1140 = vld [vmem:[%s1 + $0x1f0] sm:$0xff]
    %v1141 = vld [vmem:[%s1 + $0x1f8] sm:$0xff]
    %v1142 = vld [vmem:[%s1 + $0x200] sm:$0xff]
    %v1143 = vld [vmem:[%s1 + $0x208] sm:$0xff]
    %v1144 = vld [vmem:[%s1 + $0x210] sm:$0xff]
    %v1145 = vld [vmem:[%s1 + $0x218] sm:$0xff]
    %v1146 = vld [vmem:[%s1 + $0x220] sm:$0xff]
    %v1147 = vld [vmem:[%s1 + $0x228] sm:$0xff]
    %v1148 = vld [vmem:[%s1 + $0x230] sm:$0xff]
    %v1149 = vld [vmem:[%s1 + $0x238] sm:$0xff]
    %v1150 = vld [vmem:[%s1 + $0x240] sm:$0xff]
    %v1151 = vld [vmem:[%s1 + $0x248] sm:$0xff]
    %v1152 = vld [vmem:[%s1 + $0x250] sm:$0xff]
    %v1153 = vld [vmem:[%s1 + $0x258] sm:$0xff]
    %v1154 = vld [vmem:[%s2 + $0x1e0] sm:$0xff]
    %v1155 = vld [vmem:[%s2 + $0x1e8] sm:$0xff]
    %v1156 = vld [vmem:[%s2 + $0x1f0] sm:$0xff]
    %v1157 = vld [vmem:[%s2 + $0x1f8] sm:$0xff]
    %v1158 = vld [vmem:[%s2 + $0x200] sm:$0xff]
    %v1159 = vld [vmem:[%s2 + $0x208] sm:$0xff]
    %v1160 = vld [vmem:[%s2 + $0x210] sm:$0xff]
    %v1161 = vld [vmem:[%s2 + $0x218] sm:$0xff]
    %v1162 = vld [vmem:[%s2 + $0x220] sm:$0xff]
    %v1163 = vld [vmem:[%s2 + $0x228] sm:$0xff]
    %v1164 = vld [vmem:[%s2 + $0x230] sm:$0xff]
    %v1165 = vld [vmem:[%s2 + $0x238] sm:$0xff]
    %v1166 = vld [vmem:[%s2 + $0x240] sm:$0xff]
    %v1167 = vld [vmem:[%s2 + $0x248] sm:$0xff]
    %v1168 = vld [vmem:[%s2 + $0x250] sm:$0xff]
    %v1169 = vld [vmem:[%s2 + $0x258] sm:$0xff]
    %1171 = vset.pattern.permute.xlu0 0
    %1172 = vperm.xlu0 %1171, %v1154
    %v1173 = vpop.permute.xlu0 %1172
    %1176 = vset.pattern.permute.xlu0 0
    %1177 = vperm.xlu0 %1176, %v1155
    %v1178 = vpop.permute.xlu0 %1177
    %1181 = vset.pattern.permute.xlu0 0
    %1182 = vperm.xlu0 %1181, %v1156
    %v1183 = vpop.permute.xlu0 %1182
    %1186 = vset.pattern.permute.xlu0 0
    %1187 = vperm.xlu0 %1186, %v1157
    %v1188 = vpop.permute.xlu0 %1187
    %1191 = vset.pattern.permute.xlu0 0
    %1192 = vperm.xlu0 %1191, %v1158
    %v1193 = vpop.permute.xlu0 %1192
    %1196 = vset.pattern.permute.xlu0 0
    %1197 = vperm.xlu0 %1196, %v1159
    %v1198 = vpop.permute.xlu0 %1197
    %1201 = vset.pattern.permute.xlu0 0
    %1202 = vperm.xlu0 %1201, %v1160
    %v1203 = vpop.permute.xlu0 %1202
    %1206 = vset.pattern.permute.xlu0 0
    %1207 = vperm.xlu0 %1206, %v1161
    %v1208 = vpop.permute.xlu0 %1207
    %1211 = vset.pattern.permute.xlu0 0
    %1212 = vperm.xlu0 %1211, %v1162
    %v1213 = vpop.permute.xlu0 %1212
    %1216 = vset.pattern.permute.xlu0 0
    %1217 = vperm.xlu0 %1216, %v1163
    %v1218 = vpop.permute.xlu0 %1217
    %1221 = vset.pattern.permute.xlu0 0
    %1222 = vperm.xlu0 %1221, %v1164
    %v1223 = vpop.permute.xlu0 %1222
    %1226 = vset.pattern.permute.xlu0 0
    %1227 = vperm.xlu0 %1226, %v1165
    %v1228 = vpop.permute.xlu0 %1227
    %1231 = vset.pattern.permute.xlu0 0
    %1232 = vperm.xlu0 %1231, %v1166
    %v1233 = vpop.permute.xlu0 %1232
    %1236 = vset.pattern.permute.xlu0 0
    %1237 = vperm.xlu0 %1236, %v1167
    %v1238 = vpop.permute.xlu0 %1237
    %1241 = vset.pattern.permute.xlu0 0
    %1242 = vperm.xlu0 %1241, %v1168
    %v1243 = vpop.permute.xlu0 %1242
    %1246 = vset.pattern.permute.xlu0 0
    %1247 = vperm.xlu0 %1246, %v1169
    %v1248 = vpop.permute.xlu0 %1247
    %v1266 = vunpack.c.l.b16 %v1138
    %v1267 = vunpack.c.h.b16 %v1138
    %v1268 = vunpack.c.l.b16 %v1139
    %v1269 = vunpack.c.h.b16 %v1139
    %v1270 = vunpack.c.l.b16 %v1140
    %v1271 = vunpack.c.h.b16 %v1140
    %v1272 = vunpack.c.l.b16 %v1141
    %v1273 = vunpack.c.h.b16 %v1141
    %v1274 = vunpack.c.l.b16 %v1142
    %v1275 = vunpack.c.h.b16 %v1142
    %v1276 = vunpack.c.l.b16 %v1143
    %v1277 = vunpack.c.h.b16 %v1143
    %v1278 = vunpack.c.l.b16 %v1144
    %v1279 = vunpack.c.h.b16 %v1144
    %v1280 = vunpack.c.l.b16 %v1145
    %v1281 = vunpack.c.h.b16 %v1145
    %v1282 = vunpack.c.l.b16 %v1146
    %v1283 = vunpack.c.h.b16 %v1146
    %v1284 = vunpack.c.l.b16 %v1147
    %v1285 = vunpack.c.h.b16 %v1147
    %v1286 = vunpack.c.l.b16 %v1148
    %v1287 = vunpack.c.h.b16 %v1148
    %v1288 = vunpack.c.l.b16 %v1149
    %v1289 = vunpack.c.h.b16 %v1149
    %v1290 = vunpack.c.l.b16 %v1150
    %v1291 = vunpack.c.h.b16 %v1150
    %v1292 = vunpack.c.l.b16 %v1151
    %v1293 = vunpack.c.h.b16 %v1151
    %v1294 = vunpack.c.l.b16 %v1152
    %v1295 = vunpack.c.h.b16 %v1152
    %v1296 = vunpack.c.l.b16 %v1153
    %v1297 = vunpack.c.h.b16 %v1153
    %v1298 = vpack.c.b16 %v1268, %v1266
    %v1299 = vpack.c.b16 %v1269, %v1267
    %v1300 = vpack.c.b16 %v1272, %v1270
    %v1301 = vpack.c.b16 %v1273, %v1271
    %v1302 = vpack.c.b16 %v1276, %v1274
    %v1303 = vpack.c.b16 %v1277, %v1275
    %v1304 = vpack.c.b16 %v1280, %v1278
    %v1305 = vpack.c.b16 %v1281, %v1279
    %v1306 = vpack.c.b16 %v1284, %v1282
    %v1307 = vpack.c.b16 %v1285, %v1283
    %v1308 = vpack.c.b16 %v1288, %v1286
    %v1309 = vpack.c.b16 %v1289, %v1287
    %v1310 = vpack.c.b16 %v1292, %v1290
    %v1311 = vpack.c.b16 %v1293, %v1291
    %v1312 = vpack.c.b16 %v1296, %v1294
    %v1313 = vpack.c.b16 %v1297, %v1295
    %1330 = vmatprep.subr.bf16.mxu0 0
    %1331 = vmatpush1.bf16.msra.mxu0 %v1122
    %1332 = vmatprep.subr.bf16.mxu0 0
    %1333 = vmatpush1.bf16.msra.mxu0 %v1123
    %1334 = vmatprep.subr.bf16.mxu0 0
    %1335 = vmatpush1.bf16.msra.mxu0 %v1124
    %1336 = vmatprep.subr.bf16.mxu0 0
    %1337 = vmatpush1.bf16.msra.mxu0 %v1125
    %1338 = vmatprep.subr.bf16.mxu0 0
    %1339 = vmatpush1.bf16.msra.mxu0 %v1126
    %1340 = vmatprep.subr.bf16.mxu0 0
    %1341 = vmatpush1.bf16.msra.mxu0 %v1127
    %1342 = vmatprep.subr.bf16.mxu0 0
    %1343 = vmatpush1.bf16.msra.mxu0 %v1128
    %1344 = vmatprep.subr.bf16.mxu0 0
    %1345 = vmatpush1.bf16.msra.mxu0 %v1129
    %1346 = vmatprep.subr.bf16.mxu0 0
    %1347 = vmatpush1.bf16.msra.mxu0 %v1130
    %1348 = vmatprep.subr.bf16.mxu0 0
    %1349 = vmatpush1.bf16.msra.mxu0 %v1131
    %1350 = vmatprep.subr.bf16.mxu0 0
    %1351 = vmatpush1.bf16.msra.mxu0 %v1132
    %1352 = vmatprep.subr.bf16.mxu0 0
    %1353 = vmatpush1.bf16.msra.mxu0 %v1133
    %1354 = vmatprep.subr.bf16.mxu0 0
    %1355 = vmatpush1.bf16.msra.mxu0 %v1134
    %1356 = vmatprep.subr.bf16.mxu0 0
    %1357 = vmatpush1.bf16.msra.mxu0 %v1135
    %1358 = vmatprep.subr.bf16.mxu0 0
    %1359 = vmatpush1.bf16.msra.mxu0 %v1136
    %1360 = vmatprep.subr.bf16.mxu0 0
    %1361 = vmatpush1.bf16.msra.mxu0 %v1137
    %1362 = vmatprep.mubr.bf16.mxu0 %v1299
    %1363 = vmatmul.mubr.bf16.gmra.mrb[0].mxu0 %v1298
    %v1364 = vpop.f32.mrb[0].mxu0
    %v1365 = vadd.f32 %v1173, %v1364
    %v1366 = vpop.f32.mrb[0].mxu0
    %v1367 = vpop.f32.mrb[0].mxu0
    %v1368 = vadd.f32 %v1178, %v1367
    %v1369 = vpop.f32.mrb[0].mxu0
    %1370 = vmatprep.mubr.bf16.mxu0 %v1301
    %1371 = vmatmul.mubr.bf16.gmra.mrb[0].mxu0 %v1300
    %v1372 = vpop.f32.mrb[0].mxu0
    %v1373 = vadd.f32 %v1183, %v1372
    %v1374 = vpop.f32.mrb[0].mxu0
    %v1375 = vpop.f32.mrb[0].mxu0
    %v1376 = vadd.f32 %v1188, %v1375
    %v1377 = vpop.f32.mrb[0].mxu0
    %1378 = vmatprep.mubr.bf16.mxu0 %v1303
    %1379 = vmatmul.mubr.bf16.gmra.mrb[0].mxu0 %v1302
    %v1380 = vpop.f32.mrb[0].mxu0
    %v1381 = vadd.f32 %v1193, %v1380
    %v1382 = vpop.f32.mrb[0].mxu0
    %v1383 = vpop.f32.mrb[0].mxu0
    %v1384 = vadd.f32 %v1198, %v1383
    %v1385 = vpop.f32.mrb[0].mxu0
    %1386 = vmatprep.mubr.bf16.mxu0 %v1305
    %1387 = vmatmul.mubr.bf16.gmra.mrb[0].mxu0 %v1304
    %v1388 = vpop.f32.mrb[0].mxu0
    %v1389 = vadd.f32 %v1203, %v1388
    %v1390 = vpop.f32.mrb[0].mxu0
    %v1391 = vpop.f32.mrb[0].mxu0
    %v1392 = vadd.f32 %v1208, %v1391
    %v1393 = vpop.f32.mrb[0].mxu0
    %1394 = vmatprep.mubr.bf16.mxu0 %v1307
    %1395 = vmatmul.mubr.bf16.gmra.mrb[0].mxu0 %v1306
    %v1396 = vpop.f32.mrb[0].mxu0
    %v1397 = vadd.f32 %v1213, %v1396
    %v1398 = vpop.f32.mrb[0].mxu0
    %v1399 = vpop.f32.mrb[0].mxu0
    %v1400 = vadd.f32 %v1218, %v1399
    %v1401 = vpop.f32.mrb[0].mxu0
    %1402 = vmatprep.mubr.bf16.mxu0 %v1309
    %1403 = vmatmul.mubr.bf16.gmra.mrb[0].mxu0 %v1308
    %v1404 = vpop.f32.mrb[0].mxu0
    %v1405 = vadd.f32 %v1223, %v1404
    %v1406 = vpop.f32.mrb[0].mxu0
    %v1407 = vpop.f32.mrb[0].mxu0
    %v1408 = vadd.f32 %v1228, %v1407
    %v1409 = vpop.f32.mrb[0].mxu0
    %1410 = vmatprep.mubr.bf16.mxu0 %v1311
    %1411 = vmatmul.mubr.bf16.gmra.mrb[0].mxu0 %v1310
    %v1412 = vpop.f32.mrb[0].mxu0
    %v1413 = vadd.f32 %v1233, %v1412
    %v1414 = vpop.f32.mrb[0].mxu0
    %v1415 = vpop.f32.mrb[0].mxu0
    %v1416 = vadd.f32 %v1238, %v1415
    %v1417 = vpop.f32.mrb[0].mxu0
    %1418 = vmatprep.mubr.bf16.mxu0 %v1313
    %1419 = vmatmul.mubr.bf16.gmra.mrb[0].mxu0 %v1312
    %v1420 = vpop.f32.mrb[0].mxu0
    %v1421 = vadd.f32 %v1243, %v1420
    %v1422 = vpop.f32.mrb[0].mxu0
    %v1423 = vpop.f32.mrb[0].mxu0
    %v1424 = vadd.f32 %v1248, %v1423
    %v1425 = vpop.f32.mrb[0].mxu0
    %1426 = vdwg.mxu0
    %v1427 = vmax.f32 %v1365, 0.0
    %v1428 = vmax.f32 %v1368, 0.0
    %v1429 = vmax.f32 %v1373, 0.0
    %v1430 = vmax.f32 %v1376, 0.0
    %v1431 = vmax.f32 %v1381, 0.0
    %v1432 = vmax.f32 %v1384, 0.0
    %v1433 = vmax.f32 %v1389, 0.0
    %v1434 = vmax.f32 %v1392, 0.0
    %v1435 = vmax.f32 %v1397, 0.0
    %v1436 = vmax.f32 %v1400, 0.0
    %v1437 = vmax.f32 %v1405, 0.0
    %v1438 = vmax.f32 %v1408, 0.0
    %v1439 = vmax.f32 %v1413, 0.0
    %v1440 = vmax.f32 %v1416, 0.0
    %v1441 = vmax.f32 %v1421, 0.0
    %v1442 = vmax.f32 %v1424, 0.0
    %v1443 = vpack.c.bf16 %v1428, %v1427
    %v1444 = vpack.c.bf16 %v1430, %v1429
    %v1445 = vpack.c.bf16 %v1432, %v1431
    %v1446 = vpack.c.bf16 %v1434, %v1433
    %v1447 = vpack.c.bf16 %v1436, %v1435
    %v1448 = vpack.c.bf16 %v1438, %v1437
    %v1449 = vpack.c.bf16 %v1440, %v1439
    %v1450 = vpack.c.bf16 %v1442, %v1441
    %v1451 = vld [vmem:[%s1 + $0x260] sm:$0xf]
    %v1452 = vld [vmem:[%s1 + $0x268] sm:$0xf]
    %v1453 = vld [vmem:[%s1 + $0x270] sm:$0xf]
    %v1454 = vld [vmem:[%s1 + $0x278] sm:$0xf]
    %v1455 = vld [vmem:[%s1 + $0x280] sm:$0xf]
    %v1456 = vld [vmem:[%s1 + $0x288] sm:$0xf]
    %v1457 = vld [vmem:[%s1 + $0x290] sm:$0xf]
    %v1458 = vld [vmem:[%s1 + $0x298] sm:$0xf]
    %v1459 = vld [vmem:[%s2 + $0x260] sm:$0xff]
    %v1460 = vld [vmem:[%s2 + $0x268] sm:$0xff]
    %v1461 = vld [vmem:[%s2 + $0x270] sm:$0xff]
    %v1462 = vld [vmem:[%s2 + $0x278] sm:$0xff]
    %v1463 = vld [vmem:[%s2 + $0x280] sm:$0xff]
    %v1464 = vld [vmem:[%s2 + $0x288] sm:$0xff]
    %v1465 = vld [vmem:[%s2 + $0x290] sm:$0xff]
    %v1466 = vld [vmem:[%s2 + $0x298] sm:$0xff]
    %1468 = vset.pattern.permute.xlu0 0
    %1469 = vperm.xlu0 %1468, %v1459
    %v1470 = vpop.permute.xlu0 %1469
    %1473 = vset.pattern.permute.xlu0 0
    %1474 = vperm.xlu0 %1473, %v1460
    %v1475 = vpop.permute.xlu0 %1474
    %1478 = vset.pattern.permute.xlu0 0
    %1479 = vperm.xlu0 %1478, %v1461
    %v1480 = vpop.permute.xlu0 %1479
    %1483 = vset.pattern.permute.xlu0 0
    %1484 = vperm.xlu0 %1483, %v1462
    %v1485 = vpop.permute.xlu0 %1484
    %1488 = vset.pattern.permute.xlu0 0
    %1489 = vperm.xlu0 %1488, %v1463
    %v1490 = vpop.permute.xlu0 %1489
    %1493 = vset.pattern.permute.xlu0 0
    %1494 = vperm.xlu0 %1493, %v1464
    %v1495 = vpop.permute.xlu0 %1494
    %1498 = vset.pattern.permute.xlu0 0
    %1499 = vperm.xlu0 %1498, %v1465
    %v1500 = vpop.permute.xlu0 %1499
    %1503 = vset.pattern.permute.xlu0 0
    %1504 = vperm.xlu0 %1503, %v1466
    %v1505 = vpop.permute.xlu0 %1504
    %v1515 = vunpack.c.l.b16 %v1451
    %v1516 = vunpack.c.l.b16 %v1452
    %v1517 = vunpack.c.l.b16 %v1453
    %v1518 = vunpack.c.l.b16 %v1454
    %v1519 = vunpack.c.l.b16 %v1455
    %v1520 = vunpack.c.l.b16 %v1456
    %v1521 = vunpack.c.l.b16 %v1457
    %v1522 = vunpack.c.l.b16 %v1458
    %v1523 = vpack.c.b16 %v1516, %v1515
    %v1524 = vpack.c.b16 %v1518, %v1517
    %v1525 = vpack.c.b16 %v1520, %v1519
    %v1526 = vpack.c.b16 %v1522, %v1521
    %1531 = vmatprep.subr.bf16.mxu0 0
    %1532 = vmatpush1.bf16.msra.mxu0 %v1443
    %1533 = vmatprep.subr.bf16.mxu0 0
    %1534 = vmatpush1.bf16.msra.mxu0 %v1444
    %1535 = vmatprep.subr.bf16.mxu0 0
    %1536 = vmatpush1.bf16.msra.mxu0 %v1445
    %1537 = vmatprep.subr.bf16.mxu0 0
    %1538 = vmatpush1.bf16.msra.mxu0 %v1446
    %1539 = vmatprep.subr.bf16.mxu0 0
    %1540 = vmatpush1.bf16.msra.mxu0 %v1447
    %1541 = vmatprep.subr.bf16.mxu0 0
    %1542 = vmatpush1.bf16.msra.mxu0 %v1448
    %1543 = vmatprep.subr.bf16.mxu0 0
    %1544 = vmatpush1.bf16.msra.mxu0 %v1449
    %1545 = vmatprep.subr.bf16.mxu0 0
    %1546 = vmatpush1.bf16.msra.mxu0 %v1450
    %1547 = vmatprep.subr.bf16.mxu0 0
    %1548 = vmatpush1.bf16.msra.mxu0 0
    %1549 = vmatprep.subr.bf16.mxu0 0
    %1550 = vmatpush1.bf16.msra.mxu0 0
    %1551 = vmatprep.subr.bf16.mxu0 0
    %1552 = vmatpush1.bf16.msra.mxu0 0
    %1553 = vmatprep.subr.bf16.mxu0 0
    %1554 = vmatpush1.bf16.msra.mxu0 0
    %1555 = vmatprep.subr.bf16.mxu0 0
    %1556 = vmatpush1.bf16.msra.mxu0 0
    %1557 = vmatprep.subr.bf16.mxu0 0
    %1558 = vmatpush1.bf16.msra.mxu0 0
    %1559 = vmatprep.subr.bf16.mxu0 0
    %1560 = vmatpush1.bf16.msra.mxu0 0
    %1561 = vmatprep.subr.bf16.mxu0 0
    %1562 = vmatpush1.bf16.msra.mxu0 0
    %1563 = vmatprep.mubr.bf16.mxu0 0
    %1564 = vmatmul.mubr.bf16.gmra.mrb[0].mxu0 %v1523
    %v1565 = vpop.f32.mrb[0].mxu0
    %v1566 = vadd.f32 %v1470, %v1565
    %v1567 = vpop.f32.mrb[0].mxu0
    %v1568 = vpop.f32.mrb[0].mxu0
    %v1569 = vadd.f32 %v1475, %v1568
    %v1570 = vpop.f32.mrb[0].mxu0
    %1571 = vmatprep.mubr.bf16.mxu0 0
    %1572 = vmatmul.mubr.bf16.gmra.mrb[0].mxu0 %v1524
    %v1573 = vpop.f32.mrb[0].mxu0
    %v1574 = vadd.f32 %v1480, %v1573
    %v1575 = vpop.f32.mrb[0].mxu0
    %v1576 = vpop.f32.mrb[0].mxu0
    %v1577 = vadd.f32 %v1485, %v1576
    %v1578 = vpop.f32.mrb[0].mxu0
    %1579 = vmatprep.mubr.bf16.mxu0 0
    %1580 = vmatmul.mubr.bf16.gmra.mrb[0].mxu0 %v1525
    %v1581 = vpop.f32.mrb[0].mxu0
    %v1582 = vadd.f32 %v1490, %v1581
    %v1583 = vpop.f32.mrb[0].mxu0
    %v1584 = vpop.f32.mrb[0].mxu0
    %v1585 = vadd.f32 %v1495, %v1584
    %v1586 = vpop.f32.mrb[0].mxu0
    %1587 = vmatprep.mubr.bf16.mxu0 0
    %1588 = vmatmul.mubr.bf16.gmra.mrb[0].mxu0 %v1526
    %v1589 = vpop.f32.mrb[0].mxu0
    %v1590 = vadd.f32 %v1500, %v1589
    %v1591 = vpop.f32.mrb[0].mxu0
    %v1592 = vpop.f32.mrb[0].mxu0
    %v1593 = vadd.f32 %v1505, %v1592
    %v1594 = vpop.f32.mrb[0].mxu0
    %1595 = vdwg.mxu0
    %v1596 = vmax.f32 %v1566, 0.0
    %v1597 = vmax.f32 %v1569, 0.0
    %v1598 = vmax.f32 %v1574, 0.0
    %v1599 = vmax.f32 %v1577, 0.0
    %v1600 = vmax.f32 %v1582, 0.0
    %v1601 = vmax.f32 %v1585, 0.0
    %v1602 = vmax.f32 %v1590, 0.0
    %v1603 = vmax.f32 %v1593, 0.0
    %v1604 = vpack.c.bf16 %v1597, %v1596
    %v1605 = vpack.c.bf16 %v1599, %v1598
    %v1606 = vpack.c.bf16 %v1601, %v1600
    %v1607 = vpack.c.bf16 %v1603, %v1602
    %v1608 = vld [vmem:[%s1 + $0x2a0] sm:$0xf]
    %v1609 = vld [vmem:[%s1 + $0x2a8] sm:$0xf]
    %v1610 = vld [vmem:[%s1 + $0x2b0] sm:$0xf]
    %v1611 = vld [vmem:[%s1 + $0x2b8] sm:$0xf]
    %v1612 = vld [vmem:[%s2 + $0x2a0] sm:$0xff]
    %v1613 = vld [vmem:[%s2 + $0x2a8] sm:$0xff]
    %v1614 = vld [vmem:[%s2 + $0x2b0] sm:$0xff]
    %v1615 = vld [vmem:[%s2 + $0x2b8] sm:$0xff]
    %1617 = vset.pattern.permute.xlu0 0
    %1618 = vperm.xlu0 %1617, %v1612
    %v1619 = vpop.permute.xlu0 %1618
    %1622 = vset.pattern.permute.xlu0 0
    %1623 = vperm.xlu0 %1622, %v1613
    %v1624 = vpop.permute.xlu0 %1623
    %1627 = vset.pattern.permute.xlu0 0
    %1628 = vperm.xlu0 %1627, %v1614
    %v1629 = vpop.permute.xlu0 %1628
    %1632 = vset.pattern.permute.xlu0 0
    %1633 = vperm.xlu0 %1632, %v1615
    %v1634 = vpop.permute.xlu0 %1633
    %v1640 = vunpack.c.l.b16 %v1608
    %v1641 = vunpack.c.l.b16 %v1609
    %v1642 = vunpack.c.l.b16 %v1610
    %v1643 = vunpack.c.l.b16 %v1611
    %v1644 = vpack.c.b16 %v1641, %v1640
    %v1645 = vpack.c.b16 %v1643, %v1642
    %v1647 = vsel %vm463, %v1644, 0
    %v1650 = vsel %vm463, %v1645, 0
    %1652 = vmatprep.subr.bf16.mxu0 0
    %1653 = vmatpush1.bf16.msra.mxu0 %v1604
    %1654 = vmatprep.subr.bf16.mxu0 0
    %1655 = vmatpush1.bf16.msra.mxu0 %v1605
    %1656 = vmatprep.subr.bf16.mxu0 0
    %1657 = vmatpush1.bf16.msra.mxu0 %v1606
    %1658 = vmatprep.subr.bf16.mxu0 0
    %1659 = vmatpush1.bf16.msra.mxu0 %v1607
    %1660 = vmatprep.subr.bf16.mxu0 0
    %1661 = vmatpush1.bf16.msra.mxu0 0
    %1662 = vmatprep.subr.bf16.mxu0 0
    %1663 = vmatpush1.bf16.msra.mxu0 0
    %1664 = vmatprep.subr.bf16.mxu0 0
    %1665 = vmatpush1.bf16.msra.mxu0 0
    %1666 = vmatprep.subr.bf16.mxu0 0
    %1667 = vmatpush1.bf16.msra.mxu0 0
    %1668 = vmatprep.subr.bf16.mxu0 0
    %1669 = vmatpush1.bf16.msra.mxu0 0
    %1670 = vmatprep.subr.bf16.mxu0 0
    %1671 = vmatpush1.bf16.msra.mxu0 0
    %1672 = vmatprep.subr.bf16.mxu0 0
    %1673 = vmatpush1.bf16.msra.mxu0 0
    %1674 = vmatprep.subr.bf16.mxu0 0
    %1675 = vmatpush1.bf16.msra.mxu0 0
    %1676 = vmatprep.subr.bf16.mxu0 0
    %1677 = vmatpush1.bf16.msra.mxu0 0
    %1678 = vmatprep.subr.bf16.mxu0 0
    %1679 = vmatpush1.bf16.msra.mxu0 0
    %1680 = vmatprep.subr.bf16.mxu0 0
    %1681 = vmatpush1.bf16.msra.mxu0 0
    %1682 = vmatprep.subr.bf16.mxu0 0
    %1683 = vmatpush1.bf16.msra.mxu0 0
    %1684 = vmatprep.mubr.bf16.mxu0 0
    %1685 = vmatmul.mubr.bf16.gmra.mrb[0].mxu0 %v1647
    %v1686 = vpop.f32.mrb[0].mxu0
    %v1687 = vadd.f32 %v1619, %v1686
    %v1688 = vpop.f32.mrb[0].mxu0
    %v1689 = vpop.f32.mrb[0].mxu0
    %v1690 = vadd.f32 %v1624, %v1689
    %v1691 = vpop.f32.mrb[0].mxu0
    %1692 = vmatprep.mubr.bf16.mxu0 0
    %1693 = vmatmul.mubr.bf16.gmra.mrb[0].mxu0 %v1650
    %v1694 = vpop.f32.mrb[0].mxu0
    %v1695 = vadd.f32 %v1629, %v1694
    %v1696 = vpop.f32.mrb[0].mxu0
    %v1697 = vpop.f32.mrb[0].mxu0
    %v1698 = vadd.f32 %v1634, %v1697
    %v1699 = vpop.f32.mrb[0].mxu0
    %1700 = vdwg.mxu0
    %v1701 = vmax.f32 %v1687, 0.0
    %v1702 = vmax.f32 %v1690, 0.0
    %v1703 = vmax.f32 %v1695, 0.0
    %v1704 = vmax.f32 %v1698, 0.0
    %v1705 = vpack.c.bf16 %v1702, %v1701
    %v1706 = vpack.c.bf16 %v1704, %v1703
    %v1707 = vld [vmem:[%s1 + $0x2c0] sm:$0xf]
    %v1708 = vld [vmem:[%s2 + $0x2c0] sm:$0xff]
    %1710 = vset.pattern.permute.xlu0 0
    %1711 = vperm.xlu0 %1710, %v1708
    %v1712 = vpop.permute.xlu0 %1711
    %v1715 = vsel %vm84, %v1707, 0
    %1717 = vmatprep.subr.bf16.mxu0 0
    %1718 = vmatpush1.bf16.msra.mxu0 %v1705
    %1719 = vmatprep.subr.bf16.mxu0 0
    %1720 = vmatpush1.bf16.msra.mxu0 %v1706
    %1721 = vmatprep.subr.bf16.mxu0 0
    %1722 = vmatpush1.bf16.msra.mxu0 0
    %1723 = vmatprep.subr.bf16.mxu0 0
    %1724 = vmatpush1.bf16.msra.mxu0 0
    %1725 = vmatprep.subr.bf16.mxu0 0
    %1726 = vmatpush1.bf16.msra.mxu0 0
    %1727 = vmatprep.subr.bf16.mxu0 0
    %1728 = vmatpush1.bf16.msra.mxu0 0
    %1729 = vmatprep.subr.bf16.mxu0 0
    %1730 = vmatpush1.bf16.msra.mxu0 0
    %1731 = vmatprep.subr.bf16.mxu0 0
    %1732 = vmatpush1.bf16.msra.mxu0 0
    %1733 = vmatprep.subr.bf16.mxu0 0
    %1734 = vmatpush1.bf16.msra.mxu0 0
    %1735 = vmatprep.subr.bf16.mxu0 0
    %1736 = vmatpush1.bf16.msra.mxu0 0
    %1737 = vmatprep.subr.bf16.mxu0 0
    %1738 = vmatpush1.bf16.msra.mxu0 0
    %1739 = vmatprep.subr.bf16.mxu0 0
    %1740 = vmatpush1.bf16.msra.mxu0 0
    %1741 = vmatprep.subr.bf16.mxu0 0
    %1742 = vmatpush1.bf16.msra.mxu0 0
    %1743 = vmatprep.subr.bf16.mxu0 0
    %1744 = vmatpush1.bf16.msra.mxu0 0
    %1745 = vmatprep.subr.bf16.mxu0 0
    %1746 = vmatpush1.bf16.msra.mxu0 0
    %1747 = vmatprep.subr.bf16.mxu0 0
    %1748 = vmatpush1.bf16.msra.mxu0 0
    %1749 = vmatprep.mubr.bf16.mxu0 0
    %1750 = vmatmul.mubr.bf16.gmra.mrb[0].mxu0 %v1715
    %v1751 = vpop.f32.mrb[0].mxu0
    %v1752 = vadd.f32 %v1712, %v1751
    %v1753 = vpop.f32.mrb[0].mxu0
    %v1754 = vpop.f32.mrb[0].mxu0
    %v1755 = vpop.f32.mrb[0].mxu0
    %1756 = vdwg.mxu0
    %1757 = vst [vmem:[#allocation5] sm:$0xff] %v1752
    // Predicated region
    $region18: #{tpu_custom_call.1} parent=1 // pred_check
      _
    $region19: #{tpu_custom_call.1} parent=1 // pred_check_branch
      %1759 = sbr.rel (0) target = $region21
    $region20: #{tpu_custom_call.1} parent=1 // pred_region
      %s1761 = ssub.s32 128, 128
      %1762 = vsyncadd [#allocation4], %s1761
      %s1764 = sshll.u32 [#allocation5], 4
      %s1765 = int_to_ptr.vmem [resolvable:$true] %s1764
      %1767 = dma.vmem_to_hbm [thread:$0]  %s1765, 128, %s3, [#allocation4]
    $region21: #{tpu_custom_call.1} parent=1 // pred_fallthru
      _
    // Predicated region
    $region22: #{tpu_custom_call.1} parent=1 // pred_check
      _
    $region23: #{tpu_custom_call.1} parent=1 // pred_check_branch
      %1769 = sbr.rel (0) target = $region25
    $region24: #{tpu_custom_call.1} parent=1 // pred_region
      %1770 = dma.done [#allocation4], 128
    $region25: #{tpu_custom_call.1} parent=1 // pred_fallthru
      _
    %1771 = vsyncpa [#allocation3], 1
    %1772 = vsyncpa [#allocation4], 1

</llo_original>
